<compile_context>
chip_gen: v5e
topology: v5e:2x2
jax: 0.10.0
libtpu: 0.0.40
codegen_flags: <defaults>
</compile_context>

<pallas_src>
import math
import functools

import jax
import jax.numpy as jnp
from jax import lax
from jax.experimental import pallas as pl
from jax.experimental.pallas import tpu as pltpu


# ----------------------------- Pallas kernel ------------------------------ #
def _encoder_block_kernel(
    q_ref, k_ref, v_ref,
    wq_ref, wk_ref, wv_ref, wo_ref, w1_ref, w2_ref,
    vecs_ref, b1_ref,
    out_ref,
    attn_acc,
    *, num_heads: int, embed_len: int, seq_len: int, batch_block: int,
    approx_softmax: bool = True,
):
    bf16 = jnp.bfloat16
    f32 = jnp.float32
    head_len = embed_len // num_heads

    # ---- packed small params (f32 rows of `vecs`) ----
    bq = vecs_ref[0:1, :]
    bk = vecs_ref[1:2, :]
    bv = vecs_ref[2:3, :]
    bo = vecs_ref[3:4, :]
    b2 = vecs_ref[4:5, :]
    ln1w = vecs_ref[5:6, :]
    ln1b = vecs_ref[6:7, :]
    ln2w = vecs_ref[7:8, :]
    ln2b = vecs_ref[8:9, :]
    b1 = b1_ref[...]                     # (1, 4E)

    xq = q_ref[...]                      # (M, E) bf16, also the residual source
    xk = k_ref[...]
    xv = v_ref[...]

    # ---- batch-fused Q/K/V projections: (M,E)@(E,E), bf16 MXU, f32 acc ----
    # 1/sqrt(dk) is already folded into wq/bq (prepare_params).
    q = jnp.dot(xq, wq_ref[...], preferred_element_type=f32) + bq
    k = jnp.dot(xk, wk_ref[...], preferred_element_type=f32) + bk
    v = jnp.dot(xv, wv_ref[...], preferred_element_type=f32) + bv
    qb = q.astype(bf16)
    kb = k.astype(bf16)
    vb = v.astype(bf16)

    # A @ B^T: contract the last dim of both operands (no explicit transpose).
    dn_nt = (((1,), (1,)), ((), ()))

    # ---- attention: per-batch scores/softmax/PV, per-head fused output proj ----
    for b in range(batch_block):              # static unroll (small)
        r0 = b * seq_len
        acc_b = None                          # (S, E) f32 accumulator
        for h in range(num_heads):            # static unroll
            lo = h * head_len
            qh = qb[r0:r0 + seq_len, lo:lo + head_len]   # (S, Dh)
            kh = kb[r0:r0 + seq_len, lo:lo + head_len]
            vh = vb[r0:r0 + seq_len, lo:lo + head_len]
            s = lax.dot_general(qh, kh, dn_nt,
                                preferred_element_type=f32)          # (S, S)
            m = jnp.max(s, axis=-1, keepdims=True)
            p = jnp.exp(s - m)
            denom = jnp.sum(p, axis=-1, keepdims=True)
            if approx_softmax:
                p = p * pl.reciprocal(denom, approx=True)   # EUP, ~1e-3 rel err
            else:
                p = p / denom
            head = jnp.dot(p.astype(bf16), vh,
                           preferred_element_type=f32)                # (S, Dh)
            # Fused output projection: wo stored (H, Dh, E) -> clean head index.
            contrib = jnp.dot(head.astype(bf16), wo_ref[h],
                              preferred_element_type=f32)             # (S, E)
            acc_b = contrib if acc_b is None else acc_b + contrib
        # Lane-dense (E-wide), sublane-aligned store into the (M, E) slab.
        attn_acc[r0:r0 + seq_len, :] = acc_b

    # ---- batch-fused epilogue on the (M, E) slab ----
    attn = attn_acc[...] + bo
    x1 = attn + xq.astype(f32)                          # residual (queries)
    mu1 = jnp.mean(x1, axis=-1, keepdims=True)
    var1 = jnp.mean((x1 - mu1) * (x1 - mu1), axis=-1, keepdims=True)
    first = (x1 - mu1) * lax.rsqrt(var1 + 1e-5) * ln1w + ln1b

    # FFN: Linear(E,4E) -> ReLU -> Linear(4E,E), all rows of the batch at once.
    h1 = jnp.dot(first.astype(bf16), w1_ref[...], preferred_element_type=f32) + b1
    h1 = jnp.maximum(h1, 0.0)
    ff = jnp.dot(h1.astype(bf16), w2_ref[...], preferred_element_type=f32) + b2

    x2 = ff + first
    mu2 = jnp.mean(x2, axis=-1, keepdims=True)
    var2 = jnp.mean((x2 - mu2) * (x2 - mu2), axis=-1, keepdims=True)
    out_ref[...] = (x2 - mu2) * lax.rsqrt(var2 + 1e-5) * ln2w + ln2b


# ------------------------- offline param preparation ----------------------- #
def prepare_params(params, *, num_heads):
    """One-time offline transform: fold 1/sqrt(dk) into wq/bq, cast matmul
    weights to bf16, reshape wo to (H, Dh, E), pack the 12 tiny bias/LN params
    into a (9, E) slab plus a (1, 4E) row (two DMAs instead of twelve)."""
    bf16 = jnp.bfloat16
    f32 = jnp.float32
    E = int(params["wq"].shape[0])
    Dh = E // num_heads
    scale = 1.0 / math.sqrt(float(E))    # PyTorch: / sqrt(self.dk), dk = embed_len

    def row(x):
        return jnp.asarray(x, f32).reshape(-1)

    return {
        "wq": (jnp.asarray(params["wq"], f32) * scale).astype(bf16),
        "wk": jnp.asarray(params["wk"], bf16),
        "wv": jnp.asarray(params["wv"], bf16),
        "wo": jnp.asarray(params["wo"], bf16).reshape(num_heads, Dh, E),
        "w1": jnp.asarray(params["w1"], bf16),
        "w2": jnp.asarray(params["w2"], bf16),
        "vecs": jnp.stack([
            row(params["bq"]) * scale,
            row(params["bk"]),
            row(params["bv"]),
            row(params["bo"]),
            row(params["b2"]),
            row(params["ln1w"]),
            row(params["ln1b"]),
            row(params["ln2w"]),
            row(params["ln2b"]),
        ], axis=0),                                          # (9, E) f32
        "b1": jnp.asarray(params["b1"], f32).reshape(1, -1),  # (1, 4E) f32
    }


# ------------------------------- wrapper ----------------------------------- #
def encoder_block(queries, keys, values, prepared, *, num_heads, batch_block=None):
    """EncoderBlock forward.

    batch_block: batches per grid step.
      - None (default): batch_block = B, one grid step total.  Best on
        single-TC v5e/v6e (no per-step pipeline overhead).
      - B // 2 on v7x: one "parallel" step per TensorCore.
    """
    B, S, E = queries.shape
    if batch_block is None:
        batch_block = B
    assert B % batch_block == 0
    grid = (B // batch_block,)
    M = batch_block * S

    bf16 = jnp.bfloat16
    # Batch fused into the M dimension; activations DMA'd as bf16 (half bytes).
    q2 = queries.astype(bf16).reshape(B * S, E)
    k2 = keys.astype(bf16).reshape(B * S, E)
    v2 = values.astype(bf16).reshape(B * S, E)

    def act_spec():
        return pl.BlockSpec((M, E), lambda i: (i, 0))

    def full_spec(arr):
        nd = arr.ndim
        # Constant index_map: identical block across the grid -> fetched once.
        return pl.BlockSpec(arr.shape, lambda i, _nd=nd: (0,) * _nd)

    w_names = ["wq", "wk", "wv", "wo", "w1", "w2", "vecs", "b1"]
    weights = [prepared[n] for n in w_names]

    kernel = functools.partial(
        _encoder_block_kernel, num_heads=num_heads, embed_len=E,
        seq_len=S, batch_block=batch_block)

    # Advisory cost estimate so XLA schedules neighbors around the call sanely.
    flops = int(24 * B * S * E * E + 4 * B * S * S * E)
    transcendentals = int(B * num_heads * S * S + 4 * B * S)
    bytes_accessed = int(q2.nbytes + k2.nbytes + v2.nbytes
                         + B * S * E * 4
                         + sum(int(w.nbytes) for w in weights))

    out = pl.pallas_call(
        kernel,
        out_shape=jax.ShapeDtypeStruct((B * S, E), jnp.float32),
        grid_spec=pltpu.PrefetchScalarGridSpec(
            num_scalar_prefetch=0,
            grid=grid,
            in_specs=[act_spec(), act_spec(), act_spec()]
                     + [full_spec(w) for w in weights],
            out_specs=pl.BlockSpec((M, E), lambda i: (i, 0)),
            scratch_shapes=[pltpu.VMEM((M, E), jnp.float32)],  # attn assembly slab
        ),
        compiler_params=pltpu.CompilerParams(
            dimension_semantics=("parallel",),
            vmem_limit_bytes=32 * 1024 * 1024,
        ),
        cost_estimate=pl.CostEstimate(
            flops=flops,
            transcendentals=transcendentals,
            bytes_accessed=bytes_accessed),
    )(q2, k2, v2, *weights)
    return out.reshape(B, S, E)


# --------------------------- pure-JAX reference ----------------------------- #
def encoder_block_ref(queries, keys, values, params, *, num_heads):
    """Reference with the same bf16-at-the-MXU-boundary, f32-accumulation math
    (scale applied the standard, un-folded way to validate the folding)."""
    B, S, E = queries.shape
    Dh = E // num_heads
    scale = 1.0 / math.sqrt(float(E))
    bf16 = jnp.bfloat16

    qx = queries.astype(bf16).astype(jnp.float32)   # mirror bf16 activation DMA
    kx = keys.astype(bf16).astype(jnp.float32)
    vx = values.astype(bf16).astype(jnp.float32)

    def mm(x, w):
        return jnp.dot(x.astype(bf16), jnp.asarray(w, bf16),
                       preferred_element_type=jnp.float32)

    def bias(b):
        return jnp.asarray(b, jnp.float32).reshape(1, 1, -1)

    def ln(x, w, b):
        w = jnp.asarray(w, jnp.float32).reshape(1, 1, -1)
        b = jnp.asarray(b, jnp.float32).reshape(1, 1, -1)
        mu = jnp.mean(x, -1, keepdims=True)
        var = jnp.mean((x - mu) ** 2, -1, keepdims=True)
        return (x - mu) * lax.rsqrt(var + 1e-5) * w + b

    q = mm(qx, params["wq"]) + bias(params["bq"])
    k = mm(kx, params["wk"]) + bias(params["bk"])
    v = mm(vx, params["wv"]) + bias(params["bv"])
    q = q * scale
    q = q.reshape(B, S, num_heads, Dh).transpose(0, 2, 1, 3)
    k = k.reshape(B, S, num_heads, Dh).transpose(0, 2, 1, 3)
    v = v.reshape(B, S, num_heads, Dh).transpose(0, 2, 1, 3)
    scores = jnp.einsum("bhqd,bhkd->bhqk", q.astype(bf16), k.astype(bf16),
                        preferred_element_type=jnp.float32)
    p = jax.nn.softmax(scores, axis=-1)
    attn = jnp.einsum("bhqk,bhkd->bhqd", p.astype(bf16), v.astype(bf16),
                      preferred_element_type=jnp.float32)
    attn = attn.transpose(0, 2, 1, 3).reshape(B, S, E)
    attn = mm(attn, params["wo"]) + bias(params["bo"])
    first = ln(attn + qx, params["ln1w"], params["ln1b"])
    h1 = jnp.maximum(mm(first, params["w1"]) + bias(params["b1"]), 0.0)
    ff = mm(h1, params["w2"]) + bias(params["b2"])
    return ln(ff + first, params["ln2w"], params["ln2b"])


# --------------------------------- main ------------------------------------ #
if __name__ == "__main__":
    # Small shapes consistent with the module's forward (scaled down from 512/8/8).
    B, S, E, H = 2, 8, 32, 4

    key = jax.random.PRNGKey(0)
    ks = jax.random.split(key, 16)

    def w(k_, shape, s=0.02):
        return jax.random.normal(k_, shape, jnp.float32) * s

    params = {
        "wq": w(ks[0], (E, E)),      "bq": w(ks[1], (E,), 0.01),
        "wk": w(ks[2], (E, E)),      "bk": w(ks[3], (E,), 0.01),
        "wv": w(ks[4], (E, E)),      "bv": w(ks[5], (E,), 0.01),
        "wo": w(ks[6], (E, E)),      "bo": w(ks[7], (E,), 0.01),
        "ln1w": jnp.ones((E,), jnp.float32), "ln1b": jnp.zeros((E,), jnp.float32),
        "w1": w(ks[8], (E, 4 * E)),  "b1": w(ks[9], (4 * E,), 0.01),
        "w2": w(ks[10], (4 * E, E)), "b2": w(ks[11], (E,), 0.01),
        "ln2w": jnp.ones((E,), jnp.float32), "ln2b": jnp.zeros((E,), jnp.float32),
    }

    queries = jax.random.normal(ks[12], (B, S, E), jnp.float32)
    keys_in = jax.random.normal(ks[13], (B, S, E), jnp.float32)
    values_in = jax.random.normal(ks[14], (B, S, E), jnp.float32)

    prepared = prepare_params(params, num_heads=H)

    # Default batch_block=B -> single grid step (single-TC v5e/v6e);
    # on v7x pass batch_block=B//2 so each TensorCore gets one step.
    out = encoder_block(queries, keys_in, values_in, prepared, num_heads=H)
    out = jax.block_until_ready(out)

    ref = encoder_block_ref(queries, keys_in, values_in, params, num_heads=H)
    assert out.shape == (B, S, E)
    err = jnp.max(jnp.abs(out - ref))
    assert jnp.allclose(out, ref, atol=2e-2, rtol=2e-2), f"max err {err}"

    print("KERNEL_OK")
</pallas_src>

<mosaic_0001>
module attributes {stable_mosaic.version = 11 : i64} {
  func.func @_encoder_block_kernel(%arg0: i32, %arg1: memref<16x32xbf16, #tpu.memory_space<vmem>>, %arg2: memref<16x32xbf16, #tpu.memory_space<vmem>>, %arg3: memref<16x32xbf16, #tpu.memory_space<vmem>>, %arg4: memref<32x32xbf16, #tpu.memory_space<vmem>>, %arg5: memref<32x32xbf16, #tpu.memory_space<vmem>>, %arg6: memref<32x32xbf16, #tpu.memory_space<vmem>>, %arg7: memref<4x8x32xbf16, #tpu.memory_space<vmem>>, %arg8: memref<32x128xbf16, #tpu.memory_space<vmem>>, %arg9: memref<128x32xbf16, #tpu.memory_space<vmem>>, %arg10: memref<9x32xf32, #tpu.memory_space<vmem>>, %arg11: memref<1x128xf32, #tpu.memory_space<vmem>>, %arg12: memref<16x32xf32, #tpu.memory_space<vmem>>, %arg13: memref<16x32xf32, #tpu.memory_space<vmem>>) attributes {dimension_semantics = [#tpu.dimension_semantics<parallel>], iteration_bounds = array<i64: 1>, scalar_prefetch = 0 : i64, scratch_operands = 1 : i64, tpu.core_type = #tpu.core_type<tc>, window_params = [{transform_indices = @transform_0, window_bounds = array<i64: 16, 32>}, {transform_indices = @transform_1, window_bounds = array<i64: 16, 32>}, {transform_indices = @transform_2, window_bounds = array<i64: 16, 32>}, {pipeline_mode = #tpu.pipeline_mode<synchronous>, transform_indices = @transform_3, window_bounds = array<i64: 32, 32>}, {pipeline_mode = #tpu.pipeline_mode<synchronous>, transform_indices = @transform_4, window_bounds = array<i64: 32, 32>}, {pipeline_mode = #tpu.pipeline_mode<synchronous>, transform_indices = @transform_5, window_bounds = array<i64: 32, 32>}, {pipeline_mode = #tpu.pipeline_mode<synchronous>, transform_indices = @transform_6, window_bounds = array<i64: 4, 8, 32>}, {pipeline_mode = #tpu.pipeline_mode<synchronous>, transform_indices = @transform_7, window_bounds = array<i64: 32, 128>}, {pipeline_mode = #tpu.pipeline_mode<synchronous>, transform_indices = @transform_8, window_bounds = array<i64: 128, 32>}, {pipeline_mode = #tpu.pipeline_mode<synchronous>, transform_indices = @transform_9, window_bounds = array<i64: 9, 32>}, {pipeline_mode = #tpu.pipeline_mode<synchronous>, transform_indices = @transform_10, window_bounds = array<i64: 1, 128>}, {transform_indices = @transform_11, window_bounds = array<i64: 16, 32>}]} {
    %c0 = arith.constant 0 : index
    %c0_0 = arith.constant 0 : index
    %0 = vector.load %arg10[%c0, %c0_0] : memref<9x32xf32, #tpu.memory_space<vmem>>, vector<1x32xf32>
    %c1 = arith.constant 1 : index
    %c0_1 = arith.constant 0 : index
    %1 = vector.load %arg10[%c1, %c0_1] : memref<9x32xf32, #tpu.memory_space<vmem>>, vector<1x32xf32>
    %c2 = arith.constant 2 : index
    %c0_2 = arith.constant 0 : index
    %2 = vector.load %arg10[%c2, %c0_2] : memref<9x32xf32, #tpu.memory_space<vmem>>, vector<1x32xf32>
    %c3 = arith.constant 3 : index
    %c0_3 = arith.constant 0 : index
    %3 = vector.load %arg10[%c3, %c0_3] : memref<9x32xf32, #tpu.memory_space<vmem>>, vector<1x32xf32>
    %c4 = arith.constant 4 : index
    %c0_4 = arith.constant 0 : index
    %4 = vector.load %arg10[%c4, %c0_4] : memref<9x32xf32, #tpu.memory_space<vmem>>, vector<1x32xf32>
    %c5 = arith.constant 5 : index
    %c0_5 = arith.constant 0 : index
    %5 = vector.load %arg10[%c5, %c0_5] : memref<9x32xf32, #tpu.memory_space<vmem>>, vector<1x32xf32>
    %c6 = arith.constant 6 : index
    %c0_6 = arith.constant 0 : index
    %6 = vector.load %arg10[%c6, %c0_6] : memref<9x32xf32, #tpu.memory_space<vmem>>, vector<1x32xf32>
    %c7 = arith.constant 7 : index
    %c0_7 = arith.constant 0 : index
    %7 = vector.load %arg10[%c7, %c0_7] : memref<9x32xf32, #tpu.memory_space<vmem>>, vector<1x32xf32>
    %c8 = arith.constant 8 : index
    %c0_8 = arith.constant 0 : index
    %8 = vector.load %arg10[%c8, %c0_8] : memref<9x32xf32, #tpu.memory_space<vmem>>, vector<1x32xf32>
    %c0_9 = arith.constant 0 : index
    %c0_10 = arith.constant 0 : index
    %9 = vector.load %arg11[%c0_9, %c0_10] : memref<1x128xf32, #tpu.memory_space<vmem>>, vector<1x128xf32>
    %c0_11 = arith.constant 0 : index
    %c0_12 = arith.constant 0 : index
    %10 = vector.load %arg1[%c0_11, %c0_12] : memref<16x32xbf16, #tpu.memory_space<vmem>>, vector<16x32xbf16>
    %c0_13 = arith.constant 0 : index
    %c0_14 = arith.constant 0 : index
    %11 = vector.load %arg2[%c0_13, %c0_14] : memref<16x32xbf16, #tpu.memory_space<vmem>>, vector<16x32xbf16>
    %c0_15 = arith.constant 0 : index
    %c0_16 = arith.constant 0 : index
    %12 = vector.load %arg3[%c0_15, %c0_16] : memref<16x32xbf16, #tpu.memory_space<vmem>>, vector<16x32xbf16>
    %c0_17 = arith.constant 0 : index
    %c0_18 = arith.constant 0 : index
    %13 = vector.load %arg4[%c0_17, %c0_18] : memref<32x32xbf16, #tpu.memory_space<vmem>>, vector<32x32xbf16>
    %cst = arith.constant dense<0.000000e+00> : vector<16x32xf32>
    %14 = tpu.matmul %10, %13, %cst {dimension_numbers = #tpu.dot_dimension_numbers<[1], [0], [0], [1], [0, 0, 1, 1], [], []>} : vector<16x32xbf16>, vector<32x32xbf16>, vector<16x32xf32> -> vector<16x32xf32>
    %15 = vector.broadcast %0 : vector<1x32xf32> to vector<16x32xf32>
    %16 = arith.addf %14, %15 : vector<16x32xf32>
    %c0_19 = arith.constant 0 : index
    %c0_20 = arith.constant 0 : index
    %17 = vector.load %arg5[%c0_19, %c0_20] : memref<32x32xbf16, #tpu.memory_space<vmem>>, vector<32x32xbf16>
    %cst_21 = arith.constant dense<0.000000e+00> : vector<16x32xf32>
    %18 = tpu.matmul %11, %17, %cst_21 {dimension_numbers = #tpu.dot_dimension_numbers<[1], [0], [0], [1], [0, 0, 1, 1], [], []>} : vector<16x32xbf16>, vector<32x32xbf16>, vector<16x32xf32> -> vector<16x32xf32>
    %19 = vector.broadcast %1 : vector<1x32xf32> to vector<16x32xf32>
    %20 = arith.addf %18, %19 : vector<16x32xf32>
    %c0_22 = arith.constant 0 : index
    %c0_23 = arith.constant 0 : index
    %21 = vector.load %arg6[%c0_22, %c0_23] : memref<32x32xbf16, #tpu.memory_space<vmem>>, vector<32x32xbf16>
    %cst_24 = arith.constant dense<0.000000e+00> : vector<16x32xf32>
    %22 = tpu.matmul %12, %21, %cst_24 {dimension_numbers = #tpu.dot_dimension_numbers<[1], [0], [0], [1], [0, 0, 1, 1], [], []>} : vector<16x32xbf16>, vector<32x32xbf16>, vector<16x32xf32> -> vector<16x32xf32>
    %23 = vector.broadcast %2 : vector<1x32xf32> to vector<16x32xf32>
    %24 = arith.addf %22, %23 : vector<16x32xf32>
    %25 = arith.truncf %16 : vector<16x32xf32> to vector<16x32xbf16>
    %26 = arith.truncf %20 : vector<16x32xf32> to vector<16x32xbf16>
    %27 = arith.truncf %24 : vector<16x32xf32> to vector<16x32xbf16>
    %28 = vector.extract_strided_slice %25 {offsets = [0, 0], sizes = [8, 8], strides = [1, 1]} : vector<16x32xbf16> to vector<8x8xbf16>
    %29 = vector.extract_strided_slice %26 {offsets = [0, 0], sizes = [8, 8], strides = [1, 1]} : vector<16x32xbf16> to vector<8x8xbf16>
    %30 = vector.extract_strided_slice %27 {offsets = [0, 0], sizes = [8, 8], strides = [1, 1]} : vector<16x32xbf16> to vector<8x8xbf16>
    %cst_25 = arith.constant dense<0.000000e+00> : vector<8x8xf32>
    %31 = tpu.matmul %28, %29, %cst_25 {dimension_numbers = #tpu.dot_dimension_numbers<[1], [1], [0], [0], [0, 0, 1, 0], [], []>} : vector<8x8xbf16>, vector<8x8xbf16>, vector<8x8xf32> -> vector<8x8xf32>
    %cst_26 = arith.constant dense<0xFF800000> : vector<8xf32>
    %32 = vector.multi_reduction <maximumf>, %31, %cst_26 [1] : vector<8x8xf32> to vector<8xf32>
    %33 = vector.shape_cast %32 : vector<8xf32> to vector<8x1xf32>
    %34 = vector.broadcast %33 : vector<8x1xf32> to vector<8x8xf32>
    %35 = arith.subf %31, %34 : vector<8x8xf32>
    %36 = math.exp %35 : vector<8x8xf32>
    %cst_27 = arith.constant dense<0.000000e+00> : vector<8xf32>
    %37 = vector.multi_reduction <add>, %36, %cst_27 [1] : vector<8x8xf32> to vector<8xf32>
    %38 = vector.shape_cast %37 : vector<8xf32> to vector<8x1xf32>
    %39 = tpu.reciprocal %38 {approx = true} : vector<8x1xf32> -> vector<8x1xf32>
    %40 = vector.broadcast %39 : vector<8x1xf32> to vector<8x8xf32>
    %41 = arith.mulf %36, %40 : vector<8x8xf32>
    %42 = arith.truncf %41 : vector<8x8xf32> to vector<8x8xbf16>
    %cst_28 = arith.constant dense<0.000000e+00> : vector<8x8xf32>
    %43 = tpu.matmul %42, %30, %cst_28 {dimension_numbers = #tpu.dot_dimension_numbers<[1], [0], [0], [1], [0, 0, 1, 1], [], []>} : vector<8x8xbf16>, vector<8x8xbf16>, vector<8x8xf32> -> vector<8x8xf32>
    %44 = arith.truncf %43 : vector<8x8xf32> to vector<8x8xbf16>
    %c0_29 = arith.constant 0 : index
    %c0_30 = arith.constant 0 : index
    %c0_31 = arith.constant 0 : index
    %45 = vector.load %arg7[%c0_29, %c0_30, %c0_31] : memref<4x8x32xbf16, #tpu.memory_space<vmem>>, vector<1x8x32xbf16>
    %46 = vector.shape_cast %45 : vector<1x8x32xbf16> to vector<8x32xbf16>
    %cst_32 = arith.constant dense<0.000000e+00> : vector<8x32xf32>
    %47 = tpu.matmul %44, %46, %cst_32 {dimension_numbers = #tpu.dot_dimension_numbers<[1], [0], [0], [1], [0, 0, 1, 1], [], []>} : vector<8x8xbf16>, vector<8x32xbf16>, vector<8x32xf32> -> vector<8x32xf32>
    %48 = vector.extract_strided_slice %25 {offsets = [0, 8], sizes = [8, 8], strides = [1, 1]} : vector<16x32xbf16> to vector<8x8xbf16>
    %49 = vector.extract_strided_slice %26 {offsets = [0, 8], sizes = [8, 8], strides = [1, 1]} : vector<16x32xbf16> to vector<8x8xbf16>
    %50 = vector.extract_strided_slice %27 {offsets = [0, 8], sizes = [8, 8], strides = [1, 1]} : vector<16x32xbf16> to vector<8x8xbf16>
    %cst_33 = arith.constant dense<0.000000e+00> : vector<8x8xf32>
    %51 = tpu.matmul %48, %49, %cst_33 {dimension_numbers = #tpu.dot_dimension_numbers<[1], [1], [0], [0], [0, 0, 1, 0], [], []>} : vector<8x8xbf16>, vector<8x8xbf16>, vector<8x8xf32> -> vector<8x8xf32>
    %cst_34 = arith.constant dense<0xFF800000> : vector<8xf32>
    %52 = vector.multi_reduction <maximumf>, %51, %cst_34 [1] : vector<8x8xf32> to vector<8xf32>
    %53 = vector.shape_cast %52 : vector<8xf32> to vector<8x1xf32>
    %54 = vector.broadcast %53 : vector<8x1xf32> to vector<8x8xf32>
    %55 = arith.subf %51, %54 : vector<8x8xf32>
    %56 = math.exp %55 : vector<8x8xf32>
    %cst_35 = arith.constant dense<0.000000e+00> : vector<8xf32>
    %57 = vector.multi_reduction <add>, %56, %cst_35 [1] : vector<8x8xf32> to vector<8xf32>
    %58 = vector.shape_cast %57 : vector<8xf32> to vector<8x1xf32>
    %59 = tpu.reciprocal %58 {approx = true} : vector<8x1xf32> -> vector<8x1xf32>
    %60 = vector.broadcast %59 : vector<8x1xf32> to vector<8x8xf32>
    %61 = arith.mulf %56, %60 : vector<8x8xf32>
    %62 = arith.truncf %61 : vector<8x8xf32> to vector<8x8xbf16>
    %cst_36 = arith.constant dense<0.000000e+00> : vector<8x8xf32>
    %63 = tpu.matmul %62, %50, %cst_36 {dimension_numbers = #tpu.dot_dimension_numbers<[1], [0], [0], [1], [0, 0, 1, 1], [], []>} : vector<8x8xbf16>, vector<8x8xbf16>, vector<8x8xf32> -> vector<8x8xf32>
    %64 = arith.truncf %63 : vector<8x8xf32> to vector<8x8xbf16>
    %c1_37 = arith.constant 1 : index
    %c0_38 = arith.constant 0 : index
    %c0_39 = arith.constant 0 : index
    %65 = vector.load %arg7[%c1_37, %c0_38, %c0_39] : memref<4x8x32xbf16, #tpu.memory_space<vmem>>, vector<1x8x32xbf16>
    %66 = vector.shape_cast %65 : vector<1x8x32xbf16> to vector<8x32xbf16>
    %cst_40 = arith.constant dense<0.000000e+00> : vector<8x32xf32>
    %67 = tpu.matmul %64, %66, %cst_40 {dimension_numbers = #tpu.dot_dimension_numbers<[1], [0], [0], [1], [0, 0, 1, 1], [], []>} : vector<8x8xbf16>, vector<8x32xbf16>, vector<8x32xf32> -> vector<8x32xf32>
    %68 = arith.addf %47, %67 : vector<8x32xf32>
    %69 = vector.extract_strided_slice %25 {offsets = [0, 16], sizes = [8, 8], strides = [1, 1]} : vector<16x32xbf16> to vector<8x8xbf16>
    %70 = vector.extract_strided_slice %26 {offsets = [0, 16], sizes = [8, 8], strides = [1, 1]} : vector<16x32xbf16> to vector<8x8xbf16>
    %71 = vector.extract_strided_slice %27 {offsets = [0, 16], sizes = [8, 8], strides = [1, 1]} : vector<16x32xbf16> to vector<8x8xbf16>
    %cst_41 = arith.constant dense<0.000000e+00> : vector<8x8xf32>
    %72 = tpu.matmul %69, %70, %cst_41 {dimension_numbers = #tpu.dot_dimension_numbers<[1], [1], [0], [0], [0, 0, 1, 0], [], []>} : vector<8x8xbf16>, vector<8x8xbf16>, vector<8x8xf32> -> vector<8x8xf32>
    %cst_42 = arith.constant dense<0xFF800000> : vector<8xf32>
    %73 = vector.multi_reduction <maximumf>, %72, %cst_42 [1] : vector<8x8xf32> to vector<8xf32>
    %74 = vector.shape_cast %73 : vector<8xf32> to vector<8x1xf32>
    %75 = vector.broadcast %74 : vector<8x1xf32> to vector<8x8xf32>
    %76 = arith.subf %72, %75 : vector<8x8xf32>
    %77 = math.exp %76 : vector<8x8xf32>
    %cst_43 = arith.constant dense<0.000000e+00> : vector<8xf32>
    %78 = vector.multi_reduction <add>, %77, %cst_43 [1] : vector<8x8xf32> to vector<8xf32>
    %79 = vector.shape_cast %78 : vector<8xf32> to vector<8x1xf32>
    %80 = tpu.reciprocal %79 {approx = true} : vector<8x1xf32> -> vector<8x1xf32>
    %81 = vector.broadcast %80 : vector<8x1xf32> to vector<8x8xf32>
    %82 = arith.mulf %77, %81 : vector<8x8xf32>
    %83 = arith.truncf %82 : vector<8x8xf32> to vector<8x8xbf16>
    %cst_44 = arith.constant dense<0.000000e+00> : vector<8x8xf32>
    %84 = tpu.matmul %83, %71, %cst_44 {dimension_numbers = #tpu.dot_dimension_numbers<[1], [0], [0], [1], [0, 0, 1, 1], [], []>} : vector<8x8xbf16>, vector<8x8xbf16>, vector<8x8xf32> -> vector<8x8xf32>
    %85 = arith.truncf %84 : vector<8x8xf32> to vector<8x8xbf16>
    %c2_45 = arith.constant 2 : index
    %c0_46 = arith.constant 0 : index
    %c0_47 = arith.constant 0 : index
    %86 = vector.load %arg7[%c2_45, %c0_46, %c0_47] : memref<4x8x32xbf16, #tpu.memory_space<vmem>>, vector<1x8x32xbf16>
    %87 = vector.shape_cast %86 : vector<1x8x32xbf16> to vector<8x32xbf16>
    %cst_48 = arith.constant dense<0.000000e+00> : vector<8x32xf32>
    %88 = tpu.matmul %85, %87, %cst_48 {dimension_numbers = #tpu.dot_dimension_numbers<[1], [0], [0], [1], [0, 0, 1, 1], [], []>} : vector<8x8xbf16>, vector<8x32xbf16>, vector<8x32xf32> -> vector<8x32xf32>
    %89 = arith.addf %68, %88 : vector<8x32xf32>
    %90 = vector.extract_strided_slice %25 {offsets = [0, 24], sizes = [8, 8], strides = [1, 1]} : vector<16x32xbf16> to vector<8x8xbf16>
    %91 = vector.extract_strided_slice %26 {offsets = [0, 24], sizes = [8, 8], strides = [1, 1]} : vector<16x32xbf16> to vector<8x8xbf16>
    %92 = vector.extract_strided_slice %27 {offsets = [0, 24], sizes = [8, 8], strides = [1, 1]} : vector<16x32xbf16> to vector<8x8xbf16>
    %cst_49 = arith.constant dense<0.000000e+00> : vector<8x8xf32>
    %93 = tpu.matmul %90, %91, %cst_49 {dimension_numbers = #tpu.dot_dimension_numbers<[1], [1], [0], [0], [0, 0, 1, 0], [], []>} : vector<8x8xbf16>, vector<8x8xbf16>, vector<8x8xf32> -> vector<8x8xf32>
    %cst_50 = arith.constant dense<0xFF800000> : vector<8xf32>
    %94 = vector.multi_reduction <maximumf>, %93, %cst_50 [1] : vector<8x8xf32> to vector<8xf32>
    %95 = vector.shape_cast %94 : vector<8xf32> to vector<8x1xf32>
    %96 = vector.broadcast %95 : vector<8x1xf32> to vector<8x8xf32>
    %97 = arith.subf %93, %96 : vector<8x8xf32>
    %98 = math.exp %97 : vector<8x8xf32>
    %cst_51 = arith.constant dense<0.000000e+00> : vector<8xf32>
    %99 = vector.multi_reduction <add>, %98, %cst_51 [1] : vector<8x8xf32> to vector<8xf32>
    %100 = vector.shape_cast %99 : vector<8xf32> to vector<8x1xf32>
    %101 = tpu.reciprocal %100 {approx = true} : vector<8x1xf32> -> vector<8x1xf32>
    %102 = vector.broadcast %101 : vector<8x1xf32> to vector<8x8xf32>
    %103 = arith.mulf %98, %102 : vector<8x8xf32>
    %104 = arith.truncf %103 : vector<8x8xf32> to vector<8x8xbf16>
    %cst_52 = arith.constant dense<0.000000e+00> : vector<8x8xf32>
    %105 = tpu.matmul %104, %92, %cst_52 {dimension_numbers = #tpu.dot_dimension_numbers<[1], [0], [0], [1], [0, 0, 1, 1], [], []>} : vector<8x8xbf16>, vector<8x8xbf16>, vector<8x8xf32> -> vector<8x8xf32>
    %106 = arith.truncf %105 : vector<8x8xf32> to vector<8x8xbf16>
    %c3_53 = arith.constant 3 : index
    %c0_54 = arith.constant 0 : index
    %c0_55 = arith.constant 0 : index
    %107 = vector.load %arg7[%c3_53, %c0_54, %c0_55] : memref<4x8x32xbf16, #tpu.memory_space<vmem>>, vector<1x8x32xbf16>
    %108 = vector.shape_cast %107 : vector<1x8x32xbf16> to vector<8x32xbf16>
    %cst_56 = arith.constant dense<0.000000e+00> : vector<8x32xf32>
    %109 = tpu.matmul %106, %108, %cst_56 {dimension_numbers = #tpu.dot_dimension_numbers<[1], [0], [0], [1], [0, 0, 1, 1], [], []>} : vector<8x8xbf16>, vector<8x32xbf16>, vector<8x32xf32> -> vector<8x32xf32>
    %110 = arith.addf %89, %109 : vector<8x32xf32>
    %c0_57 = arith.constant 0 : index
    %c0_58 = arith.constant 0 : index
    %111 = vector.load %arg13[%c0_57, %c0_58] : memref<16x32xf32, #tpu.memory_space<vmem>>, vector<8x32xf32>
    tpu.vector_store %arg13[%c0_57, %c0_58], %110 {strides = array<i32>} : memref<16x32xf32, #tpu.memory_space<vmem>>, vector<8x32xf32>,
    %112 = vector.extract_strided_slice %25 {offsets = [8, 0], sizes = [8, 8], strides = [1, 1]} : vector<16x32xbf16> to vector<8x8xbf16>
    %113 = vector.extract_strided_slice %26 {offsets = [8, 0], sizes = [8, 8], strides = [1, 1]} : vector<16x32xbf16> to vector<8x8xbf16>
    %114 = vector.extract_strided_slice %27 {offsets = [8, 0], sizes = [8, 8], strides = [1, 1]} : vector<16x32xbf16> to vector<8x8xbf16>
    %cst_59 = arith.constant dense<0.000000e+00> : vector<8x8xf32>
    %115 = tpu.matmul %112, %113, %cst_59 {dimension_numbers = #tpu.dot_dimension_numbers<[1], [1], [0], [0], [0, 0, 1, 0], [], []>} : vector<8x8xbf16>, vector<8x8xbf16>, vector<8x8xf32> -> vector<8x8xf32>
    %cst_60 = arith.constant dense<0xFF800000> : vector<8xf32>
    %116 = vector.multi_reduction <maximumf>, %115, %cst_60 [1] : vector<8x8xf32> to vector<8xf32>
    %117 = vector.shape_cast %116 : vector<8xf32> to vector<8x1xf32>
    %118 = vector.broadcast %117 : vector<8x1xf32> to vector<8x8xf32>
    %119 = arith.subf %115, %118 : vector<8x8xf32>
    %120 = math.exp %119 : vector<8x8xf32>
    %cst_61 = arith.constant dense<0.000000e+00> : vector<8xf32>
    %121 = vector.multi_reduction <add>, %120, %cst_61 [1] : vector<8x8xf32> to vector<8xf32>
    %122 = vector.shape_cast %121 : vector<8xf32> to vector<8x1xf32>
    %123 = tpu.reciprocal %122 {approx = true} : vector<8x1xf32> -> vector<8x1xf32>
    %124 = vector.broadcast %123 : vector<8x1xf32> to vector<8x8xf32>
    %125 = arith.mulf %120, %124 : vector<8x8xf32>
    %126 = arith.truncf %125 : vector<8x8xf32> to vector<8x8xbf16>
    %cst_62 = arith.constant dense<0.000000e+00> : vector<8x8xf32>
    %127 = tpu.matmul %126, %114, %cst_62 {dimension_numbers = #tpu.dot_dimension_numbers<[1], [0], [0], [1], [0, 0, 1, 1], [], []>} : vector<8x8xbf16>, vector<8x8xbf16>, vector<8x8xf32> -> vector<8x8xf32>
    %128 = arith.truncf %127 : vector<8x8xf32> to vector<8x8xbf16>
    %c0_63 = arith.constant 0 : index
    %c0_64 = arith.constant 0 : index
    %c0_65 = arith.constant 0 : index
    %129 = vector.load %arg7[%c0_63, %c0_64, %c0_65] : memref<4x8x32xbf16, #tpu.memory_space<vmem>>, vector<1x8x32xbf16>
    %130 = vector.shape_cast %129 : vector<1x8x32xbf16> to vector<8x32xbf16>
    %cst_66 = arith.constant dense<0.000000e+00> : vector<8x32xf32>
    %131 = tpu.matmul %128, %130, %cst_66 {dimension_numbers = #tpu.dot_dimension_numbers<[1], [0], [0], [1], [0, 0, 1, 1], [], []>} : vector<8x8xbf16>, vector<8x32xbf16>, vector<8x32xf32> -> vector<8x32xf32>
    %132 = vector.extract_strided_slice %25 {offsets = [8, 8], sizes = [8, 8], strides = [1, 1]} : vector<16x32xbf16> to vector<8x8xbf16>
    %133 = vector.extract_strided_slice %26 {offsets = [8, 8], sizes = [8, 8], strides = [1, 1]} : vector<16x32xbf16> to vector<8x8xbf16>
    %134 = vector.extract_strided_slice %27 {offsets = [8, 8], sizes = [8, 8], strides = [1, 1]} : vector<16x32xbf16> to vector<8x8xbf16>
    %cst_67 = arith.constant dense<0.000000e+00> : vector<8x8xf32>
    %135 = tpu.matmul %132, %133, %cst_67 {dimension_numbers = #tpu.dot_dimension_numbers<[1], [1], [0], [0], [0, 0, 1, 0], [], []>} : vector<8x8xbf16>, vector<8x8xbf16>, vector<8x8xf32> -> vector<8x8xf32>
    %cst_68 = arith.constant dense<0xFF800000> : vector<8xf32>
    %136 = vector.multi_reduction <maximumf>, %135, %cst_68 [1] : vector<8x8xf32> to vector<8xf32>
    %137 = vector.shape_cast %136 : vector<8xf32> to vector<8x1xf32>
    %138 = vector.broadcast %137 : vector<8x1xf32> to vector<8x8xf32>
    %139 = arith.subf %135, %138 : vector<8x8xf32>
    %140 = math.exp %139 : vector<8x8xf32>
    %cst_69 = arith.constant dense<0.000000e+00> : vector<8xf32>
    %141 = vector.multi_reduction <add>, %140, %cst_69 [1] : vector<8x8xf32> to vector<8xf32>
    %142 = vector.shape_cast %141 : vector<8xf32> to vector<8x1xf32>
    %143 = tpu.reciprocal %142 {approx = true} : vector<8x1xf32> -> vector<8x1xf32>
    %144 = vector.broadcast %143 : vector<8x1xf32> to vector<8x8xf32>
    %145 = arith.mulf %140, %144 : vector<8x8xf32>
    %146 = arith.truncf %145 : vector<8x8xf32> to vector<8x8xbf16>
    %cst_70 = arith.constant dense<0.000000e+00> : vector<8x8xf32>
    %147 = tpu.matmul %146, %134, %cst_70 {dimension_numbers = #tpu.dot_dimension_numbers<[1], [0], [0], [1], [0, 0, 1, 1], [], []>} : vector<8x8xbf16>, vector<8x8xbf16>, vector<8x8xf32> -> vector<8x8xf32>
    %148 = arith.truncf %147 : vector<8x8xf32> to vector<8x8xbf16>
    %c1_71 = arith.constant 1 : index
    %c0_72 = arith.constant 0 : index
    %c0_73 = arith.constant 0 : index
    %149 = vector.load %arg7[%c1_71, %c0_72, %c0_73] : memref<4x8x32xbf16, #tpu.memory_space<vmem>>, vector<1x8x32xbf16>
    %150 = vector.shape_cast %149 : vector<1x8x32xbf16> to vector<8x32xbf16>
    %cst_74 = arith.constant dense<0.000000e+00> : vector<8x32xf32>
    %151 = tpu.matmul %148, %150, %cst_74 {dimension_numbers = #tpu.dot_dimension_numbers<[1], [0], [0], [1], [0, 0, 1, 1], [], []>} : vector<8x8xbf16>, vector<8x32xbf16>, vector<8x32xf32> -> vector<8x32xf32>
    %152 = arith.addf %131, %151 : vector<8x32xf32>
    %153 = vector.extract_strided_slice %25 {offsets = [8, 16], sizes = [8, 8], strides = [1, 1]} : vector<16x32xbf16> to vector<8x8xbf16>
    %154 = vector.extract_strided_slice %26 {offsets = [8, 16], sizes = [8, 8], strides = [1, 1]} : vector<16x32xbf16> to vector<8x8xbf16>
    %155 = vector.extract_strided_slice %27 {offsets = [8, 16], sizes = [8, 8], strides = [1, 1]} : vector<16x32xbf16> to vector<8x8xbf16>
    %cst_75 = arith.constant dense<0.000000e+00> : vector<8x8xf32>
    %156 = tpu.matmul %153, %154, %cst_75 {dimension_numbers = #tpu.dot_dimension_numbers<[1], [1], [0], [0], [0, 0, 1, 0], [], []>} : vector<8x8xbf16>, vector<8x8xbf16>, vector<8x8xf32> -> vector<8x8xf32>
    %cst_76 = arith.constant dense<0xFF800000> : vector<8xf32>
    %157 = vector.multi_reduction <maximumf>, %156, %cst_76 [1] : vector<8x8xf32> to vector<8xf32>
    %158 = vector.shape_cast %157 : vector<8xf32> to vector<8x1xf32>
    %159 = vector.broadcast %158 : vector<8x1xf32> to vector<8x8xf32>
    %160 = arith.subf %156, %159 : vector<8x8xf32>
    %161 = math.exp %160 : vector<8x8xf32>
    %cst_77 = arith.constant dense<0.000000e+00> : vector<8xf32>
    %162 = vector.multi_reduction <add>, %161, %cst_77 [1] : vector<8x8xf32> to vector<8xf32>
    %163 = vector.shape_cast %162 : vector<8xf32> to vector<8x1xf32>
    %164 = tpu.reciprocal %163 {approx = true} : vector<8x1xf32> -> vector<8x1xf32>
    %165 = vector.broadcast %164 : vector<8x1xf32> to vector<8x8xf32>
    %166 = arith.mulf %161, %165 : vector<8x8xf32>
    %167 = arith.truncf %166 : vector<8x8xf32> to vector<8x8xbf16>
    %cst_78 = arith.constant dense<0.000000e+00> : vector<8x8xf32>
    %168 = tpu.matmul %167, %155, %cst_78 {dimension_numbers = #tpu.dot_dimension_numbers<[1], [0], [0], [1], [0, 0, 1, 1], [], []>} : vector<8x8xbf16>, vector<8x8xbf16>, vector<8x8xf32> -> vector<8x8xf32>
    %169 = arith.truncf %168 : vector<8x8xf32> to vector<8x8xbf16>
    %c2_79 = arith.constant 2 : index
    %c0_80 = arith.constant 0 : index
    %c0_81 = arith.constant 0 : index
    %170 = vector.load %arg7[%c2_79, %c0_80, %c0_81] : memref<4x8x32xbf16, #tpu.memory_space<vmem>>, vector<1x8x32xbf16>
    %171 = vector.shape_cast %170 : vector<1x8x32xbf16> to vector<8x32xbf16>
    %cst_82 = arith.constant dense<0.000000e+00> : vector<8x32xf32>
    %172 = tpu.matmul %169, %171, %cst_82 {dimension_numbers = #tpu.dot_dimension_numbers<[1], [0], [0], [1], [0, 0, 1, 1], [], []>} : vector<8x8xbf16>, vector<8x32xbf16>, vector<8x32xf32> -> vector<8x32xf32>
    %173 = arith.addf %152, %172 : vector<8x32xf32>
    %174 = vector.extract_strided_slice %25 {offsets = [8, 24], sizes = [8, 8], strides = [1, 1]} : vector<16x32xbf16> to vector<8x8xbf16>
    %175 = vector.extract_strided_slice %26 {offsets = [8, 24], sizes = [8, 8], strides = [1, 1]} : vector<16x32xbf16> to vector<8x8xbf16>
    %176 = vector.extract_strided_slice %27 {offsets = [8, 24], sizes = [8, 8], strides = [1, 1]} : vector<16x32xbf16> to vector<8x8xbf16>
    %cst_83 = arith.constant dense<0.000000e+00> : vector<8x8xf32>
    %177 = tpu.matmul %174, %175, %cst_83 {dimension_numbers = #tpu.dot_dimension_numbers<[1], [1], [0], [0], [0, 0, 1, 0], [], []>} : vector<8x8xbf16>, vector<8x8xbf16>, vector<8x8xf32> -> vector<8x8xf32>
    %cst_84 = arith.constant dense<0xFF800000> : vector<8xf32>
    %178 = vector.multi_reduction <maximumf>, %177, %cst_84 [1] : vector<8x8xf32> to vector<8xf32>
    %179 = vector.shape_cast %178 : vector<8xf32> to vector<8x1xf32>
    %180 = vector.broadcast %179 : vector<8x1xf32> to vector<8x8xf32>
    %181 = arith.subf %177, %180 : vector<8x8xf32>
    %182 = math.exp %181 : vector<8x8xf32>
    %cst_85 = arith.constant dense<0.000000e+00> : vector<8xf32>
    %183 = vector.multi_reduction <add>, %182, %cst_85 [1] : vector<8x8xf32> to vector<8xf32>
    %184 = vector.shape_cast %183 : vector<8xf32> to vector<8x1xf32>
    %185 = tpu.reciprocal %184 {approx = true} : vector<8x1xf32> -> vector<8x1xf32>
    %186 = vector.broadcast %185 : vector<8x1xf32> to vector<8x8xf32>
    %187 = arith.mulf %182, %186 : vector<8x8xf32>
    %188 = arith.truncf %187 : vector<8x8xf32> to vector<8x8xbf16>
    %cst_86 = arith.constant dense<0.000000e+00> : vector<8x8xf32>
    %189 = tpu.matmul %188, %176, %cst_86 {dimension_numbers = #tpu.dot_dimension_numbers<[1], [0], [0], [1], [0, 0, 1, 1], [], []>} : vector<8x8xbf16>, vector<8x8xbf16>, vector<8x8xf32> -> vector<8x8xf32>
    %190 = arith.truncf %189 : vector<8x8xf32> to vector<8x8xbf16>
    %c3_87 = arith.constant 3 : index
    %c0_88 = arith.constant 0 : index
    %c0_89 = arith.constant 0 : index
    %191 = vector.load %arg7[%c3_87, %c0_88, %c0_89] : memref<4x8x32xbf16, #tpu.memory_space<vmem>>, vector<1x8x32xbf16>
    %192 = vector.shape_cast %191 : vector<1x8x32xbf16> to vector<8x32xbf16>
    %cst_90 = arith.constant dense<0.000000e+00> : vector<8x32xf32>
    %193 = tpu.matmul %190, %192, %cst_90 {dimension_numbers = #tpu.dot_dimension_numbers<[1], [0], [0], [1], [0, 0, 1, 1], [], []>} : vector<8x8xbf16>, vector<8x32xbf16>, vector<8x32xf32> -> vector<8x32xf32>
    %194 = arith.addf %173, %193 : vector<8x32xf32>
    %c8_91 = arith.constant 8 : index
    %c0_92 = arith.constant 0 : index
    %195 = vector.load %arg13[%c8_91, %c0_92] : memref<16x32xf32, #tpu.memory_space<vmem>>, vector<8x32xf32>
    tpu.vector_store %arg13[%c8_91, %c0_92], %194 {strides = array<i32>} : memref<16x32xf32, #tpu.memory_space<vmem>>, vector<8x32xf32>,
    %c0_93 = arith.constant 0 : index
    %c0_94 = arith.constant 0 : index
    %196 = vector.load %arg13[%c0_93, %c0_94] : memref<16x32xf32, #tpu.memory_space<vmem>>, vector<16x32xf32>
    %197 = vector.broadcast %3 : vector<1x32xf32> to vector<16x32xf32>
    %198 = arith.addf %196, %197 : vector<16x32xf32>
    %199 = arith.extf %10 : vector<16x32xbf16> to vector<16x32xf32>
    %200 = arith.addf %198, %199 : vector<16x32xf32>
    %cst_95 = arith.constant dense<0.000000e+00> : vector<16xf32>
    %201 = vector.multi_reduction <add>, %200, %cst_95 [1] : vector<16x32xf32> to vector<16xf32>
    %202 = vector.shape_cast %201 : vector<16xf32> to vector<16x1xf32>
    %cst_96 = arith.constant 3.200000e+01 : f32
    %203 = vector.broadcast %cst_96 : f32 to vector<16x1xf32>
    %204 = arith.divf %202, %203 : vector<16x1xf32>
    %205 = vector.broadcast %204 : vector<16x1xf32> to vector<16x32xf32>
    %206 = arith.subf %200, %205 : vector<16x32xf32>
    %207 = vector.broadcast %204 : vector<16x1xf32> to vector<16x32xf32>
    %208 = arith.subf %200, %207 : vector<16x32xf32>
    %209 = arith.mulf %206, %208 : vector<16x32xf32>
    %cst_97 = arith.constant dense<0.000000e+00> : vector<16xf32>
    %210 = vector.multi_reduction <add>, %209, %cst_97 [1] : vector<16x32xf32> to vector<16xf32>
    %211 = vector.shape_cast %210 : vector<16xf32> to vector<16x1xf32>
    %cst_98 = arith.constant 3.200000e+01 : f32
    %212 = vector.broadcast %cst_98 : f32 to vector<16x1xf32>
    %213 = arith.divf %211, %212 : vector<16x1xf32>
    %214 = vector.broadcast %204 : vector<16x1xf32> to vector<16x32xf32>
    %215 = arith.subf %200, %214 : vector<16x32xf32>
    %cst_99 = arith.constant 9.99999974E-6 : f32
    %216 = vector.broadcast %cst_99 : f32 to vector<16x1xf32>
    %217 = arith.addf %213, %216 : vector<16x1xf32>
    %218 = math.rsqrt %217 : vector<16x1xf32>
    %219 = vector.broadcast %218 : vector<16x1xf32> to vector<16x32xf32>
    %220 = arith.mulf %215, %219 : vector<16x32xf32>
    %221 = vector.broadcast %5 : vector<1x32xf32> to vector<16x32xf32>
    %222 = arith.mulf %220, %221 : vector<16x32xf32>
    %223 = vector.broadcast %6 : vector<1x32xf32> to vector<16x32xf32>
    %224 = arith.addf %222, %223 : vector<16x32xf32>
    %225 = arith.truncf %224 : vector<16x32xf32> to vector<16x32xbf16>
    %c0_100 = arith.constant 0 : index
    %c0_101 = arith.constant 0 : index
    %226 = vector.load %arg8[%c0_100, %c0_101] : memref<32x128xbf16, #tpu.memory_space<vmem>>, vector<32x128xbf16>
    %cst_102 = arith.constant dense<0.000000e+00> : vector<16x128xf32>
    %227 = tpu.matmul %225, %226, %cst_102 {dimension_numbers = #tpu.dot_dimension_numbers<[1], [0], [0], [1], [0, 0, 1, 1], [], []>} : vector<16x32xbf16>, vector<32x128xbf16>, vector<16x128xf32> -> vector<16x128xf32>
    %228 = vector.broadcast %9 : vector<1x128xf32> to vector<16x128xf32>
    %229 = arith.addf %227, %228 : vector<16x128xf32>
    %cst_103 = arith.constant 0.000000e+00 : f32
    %230 = vector.broadcast %cst_103 : f32 to vector<16x128xf32>
    %231 = arith.maximumf %229, %230 : vector<16x128xf32>
    %232 = arith.truncf %231 : vector<16x128xf32> to vector<16x128xbf16>
    %c0_104 = arith.constant 0 : index
    %c0_105 = arith.constant 0 : index
    %233 = vector.load %arg9[%c0_104, %c0_105] : memref<128x32xbf16, #tpu.memory_space<vmem>>, vector<128x32xbf16>
    %cst_106 = arith.constant dense<0.000000e+00> : vector<16x32xf32>
    %234 = tpu.matmul %232, %233, %cst_106 {dimension_numbers = #tpu.dot_dimension_numbers<[1], [0], [0], [1], [0, 0, 1, 1], [], []>} : vector<16x128xbf16>, vector<128x32xbf16>, vector<16x32xf32> -> vector<16x32xf32>
    %235 = vector.broadcast %4 : vector<1x32xf32> to vector<16x32xf32>
    %236 = arith.addf %234, %235 : vector<16x32xf32>
    %237 = arith.addf %236, %224 : vector<16x32xf32>
    %cst_107 = arith.constant dense<0.000000e+00> : vector<16xf32>
    %238 = vector.multi_reduction <add>, %237, %cst_107 [1] : vector<16x32xf32> to vector<16xf32>
    %239 = vector.shape_cast %238 : vector<16xf32> to vector<16x1xf32>
    %cst_108 = arith.constant 3.200000e+01 : f32
    %240 = vector.broadcast %cst_108 : f32 to vector<16x1xf32>
    %241 = arith.divf %239, %240 : vector<16x1xf32>
    %242 = vector.broadcast %241 : vector<16x1xf32> to vector<16x32xf32>
    %243 = arith.subf %237, %242 : vector<16x32xf32>
    %244 = vector.broadcast %241 : vector<16x1xf32> to vector<16x32xf32>
    %245 = arith.subf %237, %244 : vector<16x32xf32>
    %246 = arith.mulf %243, %245 : vector<16x32xf32>
    %cst_109 = arith.constant dense<0.000000e+00> : vector<16xf32>
    %247 = vector.multi_reduction <add>, %246, %cst_109 [1] : vector<16x32xf32> to vector<16xf32>
    %248 = vector.shape_cast %247 : vector<16xf32> to vector<16x1xf32>
    %cst_110 = arith.constant 3.200000e+01 : f32
    %249 = vector.broadcast %cst_110 : f32 to vector<16x1xf32>
    %250 = arith.divf %248, %249 : vector<16x1xf32>
    %251 = vector.broadcast %241 : vector<16x1xf32> to vector<16x32xf32>
    %252 = arith.subf %237, %251 : vector<16x32xf32>
    %cst_111 = arith.constant 9.99999974E-6 : f32
    %253 = vector.broadcast %cst_111 : f32 to vector<16x1xf32>
    %254 = arith.addf %250, %253 : vector<16x1xf32>
    %255 = math.rsqrt %254 : vector<16x1xf32>
    %256 = vector.broadcast %255 : vector<16x1xf32> to vector<16x32xf32>
    %257 = arith.mulf %252, %256 : vector<16x32xf32>
    %258 = vector.broadcast %7 : vector<1x32xf32> to vector<16x32xf32>
    %259 = arith.mulf %257, %258 : vector<16x32xf32>
    %260 = vector.broadcast %8 : vector<1x32xf32> to vector<16x32xf32>
    %261 = arith.addf %259, %260 : vector<16x32xf32>
    %c0_112 = arith.constant 0 : index
    %c0_113 = arith.constant 0 : index
    %262 = vector.load %arg12[%c0_112, %c0_113] : memref<16x32xf32, #tpu.memory_space<vmem>>, vector<16x32xf32>
    tpu.vector_store %arg12[%c0_112, %c0_113], %261 {strides = array<i32>} : memref<16x32xf32, #tpu.memory_space<vmem>>, vector<16x32xf32>,
    return
  }
  func.func @transform_0(%arg0: i32) -> (i32, i32) {
    %c0_i32 = arith.constant 0 : i32
    %c0_i32_0 = arith.constant 0 : i32
    return %arg0, %c0_i32 : i32, i32
  }
  func.func @transform_1(%arg0: i32) -> (i32, i32) {
    %c0_i32 = arith.constant 0 : i32
    %c0_i32_0 = arith.constant 0 : i32
    return %arg0, %c0_i32 : i32, i32
  }
  func.func @transform_2(%arg0: i32) -> (i32, i32) {
    %c0_i32 = arith.constant 0 : i32
    %c0_i32_0 = arith.constant 0 : i32
    return %arg0, %c0_i32 : i32, i32
  }
  func.func @transform_3(%arg0: i32) -> (i32, i32) {
    %c0_i32 = arith.constant 0 : i32
    %c0_i32_0 = arith.constant 0 : i32
    %c0_i32_1 = arith.constant 0 : i32
    return %c0_i32, %c0_i32_0 : i32, i32
  }
  func.func @transform_4(%arg0: i32) -> (i32, i32) {
    %c0_i32 = arith.constant 0 : i32
    %c0_i32_0 = arith.constant 0 : i32
    %c0_i32_1 = arith.constant 0 : i32
    return %c0_i32, %c0_i32_0 : i32, i32
  }
  func.func @transform_5(%arg0: i32) -> (i32, i32) {
    %c0_i32 = arith.constant 0 : i32
    %c0_i32_0 = arith.constant 0 : i32
    %c0_i32_1 = arith.constant 0 : i32
    return %c0_i32, %c0_i32_0 : i32, i32
  }
  func.func @transform_6(%arg0: i32) -> (i32, i32, i32) {
    %c0_i32 = arith.constant 0 : i32
    %c0_i32_0 = arith.constant 0 : i32
    %c0_i32_1 = arith.constant 0 : i32
    %c0_i32_2 = arith.constant 0 : i32
    return %c0_i32, %c0_i32_0, %c0_i32_1 : i32, i32, i32
  }
  func.func @transform_7(%arg0: i32) -> (i32, i32) {
    %c0_i32 = arith.constant 0 : i32
    %c0_i32_0 = arith.constant 0 : i32
    %c0_i32_1 = arith.constant 0 : i32
    return %c0_i32, %c0_i32_0 : i32, i32
  }
  func.func @transform_8(%arg0: i32) -> (i32, i32) {
    %c0_i32 = arith.constant 0 : i32
    %c0_i32_0 = arith.constant 0 : i32
    %c0_i32_1 = arith.constant 0 : i32
    return %c0_i32, %c0_i32_0 : i32, i32
  }
  func.func @transform_9(%arg0: i32) -> (i32, i32) {
    %c0_i32 = arith.constant 0 : i32
    %c0_i32_0 = arith.constant 0 : i32
    %c0_i32_1 = arith.constant 0 : i32
    return %c0_i32, %c0_i32_0 : i32, i32
  }
  func.func @transform_10(%arg0: i32) -> (i32, i32) {
    %c0_i32 = arith.constant 0 : i32
    %c0_i32_0 = arith.constant 0 : i32
    %c0_i32_1 = arith.constant 0 : i32
    return %c0_i32, %c0_i32_0 : i32, i32
  }
  func.func @transform_11(%arg0: i32) -> (i32, i32) {
    %c0_i32 = arith.constant 0 : i32
    %c0_i32_0 = arith.constant 0 : i32
    return %arg0, %c0_i32 : i32, i32
  }
}

</mosaic_0001>

<llo_original>
// kernel: tpu_custom_call.1
$region0: #{tpu_custom_call.1}
  #allocation0 [shape = 'u32[]', space=smem, size = 0x4, offset = 0x4, fixed_abs, tag = 'smem constant byte address 0x4 - core index']
  #allocation1 [shape = 'u32[72,128]{1,0:T(1,128)}', space=vmem, size = 0x9000, scoped, tag = 'internal scratch']
  #allocation2 [shape = 'f32[16,32]{1,0:T(8,128)}', space=vmem, size = 0x2000, scoped, tag = 'scratch operand']
  %s0 = inlined_call_operand.hbm [shape: bf16[16,32], index: 0, kind: input, shape index: {}]
  %s1 = inlined_call_operand.hbm [shape: bf16[16,32], index: 1, kind: input, shape index: {}]
  %s2 = inlined_call_operand.hbm [shape: bf16[16,32], index: 2, kind: input, shape index: {}]
  %s3 = inlined_call_operand.vmem [shape: bf16[32,32], index: 3, kind: input, shape index: {}]
  %s4 = inlined_call_operand.vmem [shape: bf16[32,32], index: 4, kind: input, shape index: {}]
  %s5 = inlined_call_operand.vmem [shape: bf16[32,32], index: 5, kind: input, shape index: {}]
  %s6 = inlined_call_operand.vmem [shape: bf16[4,8,32], index: 6, kind: input, shape index: {}]
  %s7 = inlined_call_operand.vmem [shape: bf16[32,128], index: 7, kind: input, shape index: {}]
  %s8 = inlined_call_operand.vmem [shape: bf16[128,32], index: 8, kind: input, shape index: {}]
  %s9 = inlined_call_operand.hbm [shape: f32[9,32], index: 9, kind: input, shape index: {}]
  %s10 = inlined_call_operand.vmem [shape: f32[1,128], index: 10, kind: input, shape index: {}]
  %s11 = inlined_call_operand.hbm [shape: f32[16,32], index: 11, kind: output, shape index: {}]
  %s12 = sld [smem:[#allocation0]]
  $region70: #{tpu_custom_call.1} parent=0
    _
  %s14 = ssub.s32 1, %s12
  %s15 = scalar_select 0, %s14, %s12
  $region1: #{tpu_custom_call.1} parent=0
    #allocation3 [shape = 'u8[4096]{0}', space=vmem, size = 0x1000, scoped, tag = 'input window, operand 0, single buffered']
    #allocation4 [shape = 's32[1]{0}', space=sflag, size = 0x4, scoped, tag = 'scoped memory for tpu_custom_call.1']
    #allocation5 [shape = 's32[1]{0}', space=sflag, size = 0x4, scoped, tag = 'scoped memory for tpu_custom_call.1']
    #allocation6 [shape = 'u8[4096]{0}', space=vmem, size = 0x1000, scoped, tag = 'input window, operand 1, single buffered']
    #allocation7 [shape = 's32[1]{0}', space=sflag, size = 0x4, scoped, tag = 'scoped memory for tpu_custom_call.1']
    #allocation8 [shape = 'u8[4096]{0}', space=vmem, size = 0x1000, scoped, tag = 'input window, operand 2, single buffered']
    #allocation9 [shape = 'u8[8192]{0}', space=vmem, size = 0x2000, scoped, tag = 'input window, operand 9, single buffered']
    #allocation10 [shape = 's32[1]{0}', space=sflag, size = 0x4, scoped, tag = 'scoped memory for tpu_custom_call.1']
    #allocation11 [shape = 'u8[8192]{0}', space=vmem, size = 0x2000, scoped, tag = 'output window, operand 0, single buffered']
    %16 = vsyncpa [#allocation4], 0
    %17 = vsyncpa [#allocation7], 0
    %18 = vsyncpa [#allocation10], 0
    %19 = vsyncpa [#allocation5], 0
    // Predicated region
    $region2: #{tpu_custom_call.1} parent=1 // pred_check
      _
    $region3: #{tpu_custom_call.1} parent=1 // pred_check_branch
      %21 = sbr.rel (0) target = $region5
    $region4: #{tpu_custom_call.1} parent=1 // pred_region
      %23 = vsyncadd [#allocation4], 0
      %s24 = sshll.u32 %s0, 4
      %s25 = int_to_ptr.hbm [resolvable:$true] %s24
      %s26 = sshll.u32 [#allocation3], 4
      %s27 = int_to_ptr.vmem [resolvable:$true] %s26
      %32 = dma.hbm_to_vmem [thread:$0]  %s25, 128, %s27, [#allocation4], 64, 64, 4
    $region5: #{tpu_custom_call.1} parent=1 // pred_fallthru
      _
    // Predicated region
    $region6: #{tpu_custom_call.1} parent=1 // pred_check
      _
    $region7: #{tpu_custom_call.1} parent=1 // pred_check_branch
      %34 = sbr.rel (0) target = $region9
    $region8: #{tpu_custom_call.1} parent=1 // pred_region
      %36 = vsyncadd [#allocation7], 0
      %s37 = sshll.u32 %s1, 4
      %s38 = int_to_ptr.hbm [resolvable:$true] %s37
      %s39 = sshll.u32 [#allocation6], 4
      %s40 = int_to_ptr.vmem [resolvable:$true] %s39
      %45 = dma.hbm_to_vmem [thread:$0]  %s38, 128, %s40, [#allocation7], 64, 64, 4
    $region9: #{tpu_custom_call.1} parent=1 // pred_fallthru
      _
    // Predicated region
    $region10: #{tpu_custom_call.1} parent=1 // pred_check
      _
    $region11: #{tpu_custom_call.1} parent=1 // pred_check_branch
      %47 = sbr.rel (0) target = $region13
    $region12: #{tpu_custom_call.1} parent=1 // pred_region
      %49 = vsyncadd [#allocation7], 0
      %s50 = sshll.u32 %s2, 4
      %s51 = int_to_ptr.hbm [resolvable:$true] %s50
      %s52 = sshll.u32 [#allocation8], 4
      %s53 = int_to_ptr.vmem [resolvable:$true] %s52
      %58 = dma.hbm_to_vmem [thread:$0]  %s51, 128, %s53, [#allocation7], 64, 64, 4
    $region13: #{tpu_custom_call.1} parent=1 // pred_fallthru
      _
    // Predicated region
    $region14: #{tpu_custom_call.1} parent=1 // pred_check
      _
    $region15: #{tpu_custom_call.1} parent=1 // pred_check_branch
      %60 = sbr.rel (0) target = $region17
    $region16: #{tpu_custom_call.1} parent=1 // pred_region
      _
    $region17: #{tpu_custom_call.1} parent=1 // pred_fallthru
      _
    // Predicated region
    $region18: #{tpu_custom_call.1} parent=1 // pred_check
      _
    $region19: #{tpu_custom_call.1} parent=1 // pred_check_branch
      %62 = sbr.rel (0) target = $region21
    $region20: #{tpu_custom_call.1} parent=1 // pred_region
      _
    $region21: #{tpu_custom_call.1} parent=1 // pred_fallthru
      _
    // Predicated region
    $region22: #{tpu_custom_call.1} parent=1 // pred_check
      _
    $region23: #{tpu_custom_call.1} parent=1 // pred_check_branch
      %64 = sbr.rel (0) target = $region25
    $region24: #{tpu_custom_call.1} parent=1 // pred_region
      _
    $region25: #{tpu_custom_call.1} parent=1 // pred_fallthru
      _
    // Predicated region
    $region26: #{tpu_custom_call.1} parent=1 // pred_check
      _
    $region27: #{tpu_custom_call.1} parent=1 // pred_check_branch
      %66 = sbr.rel (0) target = $region29
    $region28: #{tpu_custom_call.1} parent=1 // pred_region
      _
    $region29: #{tpu_custom_call.1} parent=1 // pred_fallthru
      _
    // Predicated region
    $region30: #{tpu_custom_call.1} parent=1 // pred_check
      _
    $region31: #{tpu_custom_call.1} parent=1 // pred_check_branch
      %68 = sbr.rel (0) target = $region33
    $region32: #{tpu_custom_call.1} parent=1 // pred_region
      _
    $region33: #{tpu_custom_call.1} parent=1 // pred_fallthru
      _
    // Predicated region
    $region34: #{tpu_custom_call.1} parent=1 // pred_check
      _
    $region35: #{tpu_custom_call.1} parent=1 // pred_check_branch
      %70 = sbr.rel (0) target = $region37
    $region36: #{tpu_custom_call.1} parent=1 // pred_region
      _
    $region37: #{tpu_custom_call.1} parent=1 // pred_fallthru
      _
    // Predicated region
    $region38: #{tpu_custom_call.1} parent=1 // pred_check
      _
    $region39: #{tpu_custom_call.1} parent=1 // pred_check_branch
      %72 = sbr.rel (0) target = $region41
    $region40: #{tpu_custom_call.1} parent=1 // pred_region
      %74 = vsyncadd [#allocation10], 0
      %s75 = sshll.u32 %s9, 4
      %s76 = int_to_ptr.hbm [resolvable:$true] %s75
      %s77 = sshll.u32 [#allocation9], 4
      %s78 = int_to_ptr.vmem [resolvable:$true] %s77
      %83 = dma.hbm_to_vmem [thread:$0]  %s76, 256, %s78, [#allocation10], 128, 128, 8
    $region41: #{tpu_custom_call.1} parent=1 // pred_fallthru
      _
    // Predicated region
    $region42: #{tpu_custom_call.1} parent=1 // pred_check
      _
    $region43: #{tpu_custom_call.1} parent=1 // pred_check_branch
      %85 = sbr.rel (0) target = $region45
    $region44: #{tpu_custom_call.1} parent=1 // pred_region
      _
    $region45: #{tpu_custom_call.1} parent=1 // pred_fallthru
      _
    // Predicated region
    $region46: #{tpu_custom_call.1} parent=1 // pred_check
      _
    $region47: #{tpu_custom_call.1} parent=1 // pred_check_branch
      %87 = sbr.rel (0) target = $region49
    $region48: #{tpu_custom_call.1} parent=1 // pred_region
      %89 = dma.done [#allocation4], 128
    $region49: #{tpu_custom_call.1} parent=1 // pred_fallthru
      _
    // Predicated region
    $region50: #{tpu_custom_call.1} parent=1 // pred_check
      _
    $region51: #{tpu_custom_call.1} parent=1 // pred_check_branch
      %91 = sbr.rel (0) target = $region53
    $region52: #{tpu_custom_call.1} parent=1 // pred_region
      %93 = dma.done [#allocation7], 128
    $region53: #{tpu_custom_call.1} parent=1 // pred_fallthru
      _
    // Predicated region
    $region54: #{tpu_custom_call.1} parent=1 // pred_check
      _
    $region55: #{tpu_custom_call.1} parent=1 // pred_check_branch
      %95 = sbr.rel (0) target = $region57
    $region56: #{tpu_custom_call.1} parent=1 // pred_region
      %97 = dma.done [#allocation7], 128
    $region57: #{tpu_custom_call.1} parent=1 // pred_fallthru
      _
    // Predicated region
    $region58: #{tpu_custom_call.1} parent=1 // pred_check
      _
    $region59: #{tpu_custom_call.1} parent=1 // pred_check_branch
      %99 = sbr.rel (0) target = $region61
    $region60: #{tpu_custom_call.1} parent=1 // pred_region
      %101 = dma.done [#allocation10], 256
    $region61: #{tpu_custom_call.1} parent=1 // pred_fallthru
      _
    %v103 = vld [vmem:[#allocation9] sm:$0x1]
    %v104 = vld [vmem:[#allocation9 + $0x1] sm:$0x1]
    %v105 = vld [vmem:[#allocation9 + $0x2] sm:$0x1]
    %v106 = vld [vmem:[#allocation9 + $0x3] sm:$0x1]
    %v107 = vld [vmem:[#allocation9 + $0x4] sm:$0x1]
    %v108 = vld [vmem:[#allocation9 + $0x5] sm:$0x1]
    %v109 = vld [vmem:[#allocation9 + $0x6] sm:$0x1]
    %v110 = vld [vmem:[#allocation9 + $0x7] sm:$0x1]
    %v111 = vld [vmem:[#allocation9 + $0x8] sm:$0x1]
    %v112 = vld [vmem:[%s10] sm:$0x1]
    %v113 = vld [vmem:[#allocation3] sm:$0xf]
    %v114 = vld [vmem:[#allocation3 + $0x4] sm:$0xf]
    %v115 = vld [vmem:[#allocation6] sm:$0xf]
    %v116 = vld [vmem:[#allocation6 + $0x4] sm:$0xf]
    %v117 = vld [vmem:[#allocation8] sm:$0xf]
    %v118 = vld [vmem:[#allocation8 + $0x4] sm:$0xf]
    %v119 = vld [vmem:[%s3] sm:$0xf]
    %v120 = vld [vmem:[%s3 + $0x4] sm:$0xf]
    %v121 = vld [vmem:[%s3 + $0x8] sm:$0xf]
    %v122 = vld [vmem:[%s3 + $0xc] sm:$0xf]
    %v123 = vperm.slane %v103, 0
    %v126 = vunpack.c.l.b16 %v113
    %v127 = vunpack.c.l.b16 %v114
    %v128 = vpack.c.b16 %v127, %v126
    %v133 = vunpack.c.l.b16 %v119
    %v134 = vunpack.c.l.b16 %v120
    %v135 = vunpack.c.l.b16 %v121
    %v136 = vunpack.c.l.b16 %v122
    %v137 = vpack.c.b16 %v134, %v133
    %v138 = vpack.c.b16 %v136, %v135
    %vm141 = vcmask 261120
    %v143 = vsel %vm141, %v128, 0
    %145 = vmatpush.bf16.msra.mxu0 0
    %146 = vmatpush.bf16.msra.mxu0 0
    %147 = vmatpush.bf16.msra.mxu0 0
    %148 = vmatpush.bf16.msra.mxu0 0
    %149 = vmatpush.bf16.msra.mxu0 0
    %150 = vmatpush.bf16.msra.mxu0 0
    %151 = vmatpush.bf16.msra.mxu0 %v138
    %152 = vmatpush.bf16.msra.mxu0 %v137
    %153 = vmatmul.bf16.gmra.mxu0 %v143
    %v154 = vpop.f32.mrf.mxu0
    %v155 = vadd.f32 %v123, %v154
    %v156 = vpop.f32.mrf.mxu0
    %v157 = vadd.f32 %v123, %v156
    %158 = vdwg.mxu0
    %v159 = vld [vmem:[%s4] sm:$0xf]
    %v160 = vld [vmem:[%s4 + $0x4] sm:$0xf]
    %v161 = vld [vmem:[%s4 + $0x8] sm:$0xf]
    %v162 = vld [vmem:[%s4 + $0xc] sm:$0xf]
    %v163 = vperm.slane %v104, 0
    %v166 = vunpack.c.l.b16 %v115
    %v167 = vunpack.c.l.b16 %v116
    %v168 = vpack.c.b16 %v167, %v166
    %v173 = vunpack.c.l.b16 %v159
    %v174 = vunpack.c.l.b16 %v160
    %v175 = vunpack.c.l.b16 %v161
    %v176 = vunpack.c.l.b16 %v162
    %v177 = vpack.c.b16 %v174, %v173
    %v178 = vpack.c.b16 %v176, %v175
    %v182 = vsel %vm141, %v168, 0
    %184 = vmatpush.bf16.msra.mxu0 0
    %185 = vmatpush.bf16.msra.mxu0 0
    %186 = vmatpush.bf16.msra.mxu0 0
    %187 = vmatpush.bf16.msra.mxu0 0
    %188 = vmatpush.bf16.msra.mxu0 0
    %189 = vmatpush.bf16.msra.mxu0 0
    %190 = vmatpush.bf16.msra.mxu0 %v178
    %191 = vmatpush.bf16.msra.mxu0 %v177
    %192 = vmatmul.bf16.gmra.mxu0 %v182
    %v193 = vpop.f32.mrf.mxu0
    %v194 = vadd.f32 %v163, %v193
    %v195 = vpop.f32.mrf.mxu0
    %v196 = vadd.f32 %v163, %v195
    %197 = vdwg.mxu0
    %v198 = vld [vmem:[%s5] sm:$0xf]
    %v199 = vld [vmem:[%s5 + $0x4] sm:$0xf]
    %v200 = vld [vmem:[%s5 + $0x8] sm:$0xf]
    %v201 = vld [vmem:[%s5 + $0xc] sm:$0xf]
    %v202 = vperm.slane %v105, 0
    %v205 = vunpack.c.l.b16 %v117
    %v206 = vunpack.c.l.b16 %v118
    %v207 = vpack.c.b16 %v206, %v205
    %v212 = vunpack.c.l.b16 %v198
    %v213 = vunpack.c.l.b16 %v199
    %v214 = vunpack.c.l.b16 %v200
    %v215 = vunpack.c.l.b16 %v201
    %v216 = vpack.c.b16 %v213, %v212
    %v217 = vpack.c.b16 %v215, %v214
    %v221 = vsel %vm141, %v207, 0
    %223 = vmatpush.bf16.msra.mxu0 0
    %224 = vmatpush.bf16.msra.mxu0 0
    %225 = vmatpush.bf16.msra.mxu0 0
    %226 = vmatpush.bf16.msra.mxu0 0
    %227 = vmatpush.bf16.msra.mxu0 0
    %228 = vmatpush.bf16.msra.mxu0 0
    %229 = vmatpush.bf16.msra.mxu0 %v217
    %230 = vmatpush.bf16.msra.mxu0 %v216
    %231 = vmatmul.bf16.gmra.mxu0 %v221
    %v232 = vpop.f32.mrf.mxu0
    %v233 = vadd.f32 %v202, %v232
    %v234 = vpop.f32.mrf.mxu0
    %v235 = vadd.f32 %v202, %v234
    %236 = vdwg.mxu0
    %v237 = vpack.c.bf16 %v155, %v155
    %v238 = vpack.c.bf16 %v157, %v157
    %v239 = vpack.c.bf16 %v194, %v194
    %v240 = vpack.c.bf16 %v196, %v196
    %v241 = vpack.c.bf16 %v233, %v233
    %v242 = vpack.c.bf16 %v235, %v235
    %vm243 = vcmask 64512
    %v245 = vsel %vm243, %v237, 0
    %v248 = vsel %vm243, %v239, 0
    %250 = vmatpush.bf16.xpose.msra.mxu0 0
    %251 = vmatpush.bf16.xpose.msra.mxu0 0
    %252 = vmatpush.bf16.xpose.msra.mxu0 0
    %253 = vmatpush.bf16.xpose.msra.mxu0 0
    %254 = vmatpush.bf16.xpose.msra.mxu0 0
    %255 = vmatpush.bf16.xpose.msra.mxu0 0
    %256 = vmatpush.bf16.xpose.msra.mxu0 0
    %257 = vmatpush.bf16.xpose.msra.mxu0 %v248
    %258 = vmatmul.bf16.gmra.mxu0 %v245
    %v259 = vpop.f32.mrf.mxu0
    %v260 = vadd.f32 0.0, %v259
    %v261 = vpop.f32.mrf.mxu0
    %262 = vdwg.mxu0
    %v263 = vsel %vm243, %v260, -inf
    %264 = vmax.xlane.f32.xlu0 %v263
    %v265 = vpop.xlane.xlu0 %264
    %v266 = vsub.f32 %v260, %v265
    %v267 = vmul.f32 %v266, 1.442695
    %v268 = vpow.pop %v267
    %v269 = vsel %vm243, %v268, 0.0
    %270 = vadd.xlane.f32.xlu0 %v269
    %v271 = vpop.xlane.xlu0 %270
    %v272 = vrcp.pop %v271
    %v273 = vmul.f32 %v268, %v272
    %v274 = vpack.c.bf16 %v273, %v273
    %v276 = vsel %vm243, %v274, 0
    %vm278 = vcmask 1043456
    %v280 = vsel %vm278, %v241, 0
    %282 = vmatpush.bf16.msra.mxu0 0
    %283 = vmatpush.bf16.msra.mxu0 0
    %284 = vmatpush.bf16.msra.mxu0 0
    %285 = vmatpush.bf16.msra.mxu0 0
    %286 = vmatpush.bf16.msra.mxu0 0
    %287 = vmatpush.bf16.msra.mxu0 0
    %288 = vmatpush.bf16.msra.mxu0 0
    %289 = vmatpush.bf16.msra.mxu0 %v280
    %290 = vmatmul.bf16.gmra.mxu0 %v276
    %v291 = vpop.f32.mrf.mxu0
    %v292 = vadd.f32 0.0, %v291
    %v293 = vpop.f32.mrf.mxu0
    %294 = vdwg.mxu0
    %v295 = vpack.c.bf16 %v292, %v292
    %v296 = vld [vmem:[%s6] sm:$0xf]
    %v298 = vunpack.c.l.b16 %v237
    %v299 = vpack.c.b16 %v298, %v298
    %300 = vrot.lane.b32.xlu0 %v299, 120
    %v301 = vpop.permute.xlu0 %300
    %v303 = vunpack.c.l.b16 %v239
    %v304 = vpack.c.b16 %v303, %v303
    %305 = vrot.lane.b32.xlu0 %v304, 120
    %v306 = vpop.permute.xlu0 %305
    %v308 = vsel %vm243, %v301, 0
    %v311 = vsel %vm243, %v306, 0
    %313 = vmatpush.bf16.xpose.msra.mxu0 0
    %314 = vmatpush.bf16.xpose.msra.mxu0 0
    %315 = vmatpush.bf16.xpose.msra.mxu0 0
    %316 = vmatpush.bf16.xpose.msra.mxu0 0
    %317 = vmatpush.bf16.xpose.msra.mxu0 0
    %318 = vmatpush.bf16.xpose.msra.mxu0 0
    %319 = vmatpush.bf16.xpose.msra.mxu0 0
    %320 = vmatpush.bf16.xpose.msra.mxu0 %v311
    %321 = vmatmul.bf16.gmra.mxu0 %v308
    %v322 = vpop.f32.mrf.mxu0
    %v323 = vadd.f32 0.0, %v322
    %v324 = vpop.f32.mrf.mxu0
    %325 = vdwg.mxu0
    %v326 = vsel %vm243, %v323, -inf
    %327 = vmax.xlane.f32.xlu0 %v326
    %v328 = vpop.xlane.xlu0 %327
    %v329 = vsub.f32 %v323, %v328
    %v330 = vmul.f32 %v329, 1.442695
    %v331 = vpow.pop %v330
    %v332 = vsel %vm243, %v331, 0.0
    %333 = vadd.xlane.f32.xlu0 %v332
    %v334 = vpop.xlane.xlu0 %333
    %v335 = vrcp.pop %v334
    %v336 = vmul.f32 %v331, %v335
    %v337 = vpack.c.bf16 %v336, %v336
    %v339 = vunpack.c.l.b16 %v241
    %v340 = vpack.c.b16 %v339, %v339
    %341 = vrot.lane.b32.xlu0 %v340, 120
    %v342 = vpop.permute.xlu0 %341
    %v344 = vsel %vm243, %v337, 0
    %v347 = vsel %vm278, %v342, 0
    %349 = vmatpush.bf16.msra.mxu0 0
    %350 = vmatpush.bf16.msra.mxu0 0
    %351 = vmatpush.bf16.msra.mxu0 0
    %352 = vmatpush.bf16.msra.mxu0 0
    %353 = vmatpush.bf16.msra.mxu0 0
    %354 = vmatpush.bf16.msra.mxu0 0
    %355 = vmatpush.bf16.msra.mxu0 0
    %356 = vmatpush.bf16.msra.mxu0 %v347
    %357 = vmatmul.bf16.gmra.mxu0 %v344
    %v358 = vpop.f32.mrf.mxu0
    %v359 = vadd.f32 0.0, %v358
    %v360 = vpop.f32.mrf.mxu0
    %361 = vdwg.mxu0
    %v362 = vpack.c.bf16 %v359, %v359
    %s363 = scalar_lea.vmem %s6, 4
    %v364 = vld [vmem:[%s363] sm:$0xf]
    %v366 = vsel %vm243, %v362, 0
    %v369 = vsel %vm278, %v364, 0
    %371 = vmatpush.bf16.msra.mxu0 0
    %372 = vmatpush.bf16.msra.mxu0 0
    %373 = vmatpush.bf16.msra.mxu0 0
    %374 = vmatpush.bf16.msra.mxu0 0
    %375 = vmatpush.bf16.msra.mxu0 0
    %376 = vmatpush.bf16.msra.mxu0 0
    %377 = vmatpush.bf16.msra.mxu0 0
    %378 = vmatpush.bf16.msra.mxu0 %v369
    %379 = vmatmul.bf16.gmra.mxu0 %v366
    %v380 = vpop.f32.mrf.mxu0
    %v381 = vadd.f32 0.0, %v380
    %v382 = vpop.f32.mrf.mxu0
    %383 = vdwg.mxu0
    %v385 = vsel %vm243, %v295, 0
    %v388 = vsel %vm278, %v296, 0
    %390 = vmatpush.bf16.msra.mxu0 0
    %391 = vmatpush.bf16.msra.mxu0 0
    %392 = vmatpush.bf16.msra.mxu0 0
    %393 = vmatpush.bf16.msra.mxu0 0
    %394 = vmatpush.bf16.msra.mxu0 0
    %395 = vmatpush.bf16.msra.mxu0 0
    %396 = vmatpush.bf16.msra.mxu0 0
    %397 = vmatpush.bf16.msra.mxu0 %v388
    %398 = vmatmul.bf16.gmra.mxu0 %v385
    %v399 = vpop.f32.mrf.mxu0
    %v400 = vadd.f32 %v381, %v399
    %v401 = vpop.f32.mrf.mxu0
    %402 = vdwg.mxu0
    %403 = vrot.lane.b32.xlu0 %v299, 112
    %v404 = vpop.permute.xlu0 %403
    %405 = vrot.lane.b32.xlu0 %v304, 112
    %v406 = vpop.permute.xlu0 %405
    %v408 = vsel %vm243, %v404, 0
    %v411 = vsel %vm243, %v406, 0
    %413 = vmatpush.bf16.xpose.msra.mxu0 0
    %414 = vmatpush.bf16.xpose.msra.mxu0 0
    %415 = vmatpush.bf16.xpose.msra.mxu0 0
    %416 = vmatpush.bf16.xpose.msra.mxu0 0
    %417 = vmatpush.bf16.xpose.msra.mxu0 0
    %418 = vmatpush.bf16.xpose.msra.mxu0 0
    %419 = vmatpush.bf16.xpose.msra.mxu0 0
    %420 = vmatpush.bf16.xpose.msra.mxu0 %v411
    %421 = vmatmul.bf16.gmra.mxu0 %v408
    %v422 = vpop.f32.mrf.mxu0
    %v423 = vadd.f32 0.0, %v422
    %v424 = vpop.f32.mrf.mxu0
    %425 = vdwg.mxu0
    %v426 = vsel %vm243, %v423, -inf
    %427 = vmax.xlane.f32.xlu0 %v426
    %v428 = vpop.xlane.xlu0 %427
    %v429 = vsub.f32 %v423, %v428
    %v430 = vmul.f32 %v429, 1.442695
    %v431 = vpow.pop %v430
    %v432 = vsel %vm243, %v431, 0.0
    %433 = vadd.xlane.f32.xlu0 %v432
    %v434 = vpop.xlane.xlu0 %433
    %v435 = vrcp.pop %v434
    %v436 = vmul.f32 %v431, %v435
    %v437 = vpack.c.bf16 %v436, %v436
    %438 = vrot.lane.b32.xlu0 %v340, 112
    %v439 = vpop.permute.xlu0 %438
    %v441 = vsel %vm243, %v437, 0
    %v444 = vsel %vm278, %v439, 0
    %446 = vmatpush.bf16.msra.mxu0 0
    %447 = vmatpush.bf16.msra.mxu0 0
    %448 = vmatpush.bf16.msra.mxu0 0
    %449 = vmatpush.bf16.msra.mxu0 0
    %450 = vmatpush.bf16.msra.mxu0 0
    %451 = vmatpush.bf16.msra.mxu0 0
    %452 = vmatpush.bf16.msra.mxu0 0
    %453 = vmatpush.bf16.msra.mxu0 %v444
    %454 = vmatmul.bf16.gmra.mxu0 %v441
    %v455 = vpop.f32.mrf.mxu0
    %v456 = vadd.f32 0.0, %v455
    %v457 = vpop.f32.mrf.mxu0
    %458 = vdwg.mxu0
    %v459 = vpack.c.bf16 %v456, %v456
    %s460 = scalar_lea.vmem %s6, 8
    %v461 = vld [vmem:[%s460] sm:$0xf]
    %v463 = vsel %vm243, %v459, 0
    %v466 = vsel %vm278, %v461, 0
    %468 = vmatpush.bf16.msra.mxu0 0
    %469 = vmatpush.bf16.msra.mxu0 0
    %470 = vmatpush.bf16.msra.mxu0 0
    %471 = vmatpush.bf16.msra.mxu0 0
    %472 = vmatpush.bf16.msra.mxu0 0
    %473 = vmatpush.bf16.msra.mxu0 0
    %474 = vmatpush.bf16.msra.mxu0 0
    %475 = vmatpush.bf16.msra.mxu0 %v466
    %476 = vmatmul.bf16.gmra.mxu0 %v463
    %v477 = vpop.f32.mrf.mxu0
    %v478 = vadd.f32 0.0, %v477
    %v479 = vpop.f32.mrf.mxu0
    %480 = vdwg.mxu0
    %v481 = vadd.f32 %v400, %v478
    %482 = vrot.lane.b32.xlu0 %v299, 104
    %v483 = vpop.permute.xlu0 %482
    %484 = vrot.lane.b32.xlu0 %v304, 104
    %v485 = vpop.permute.xlu0 %484
    %v487 = vsel %vm243, %v483, 0
    %v490 = vsel %vm243, %v485, 0
    %492 = vmatpush.bf16.xpose.msra.mxu0 0
    %493 = vmatpush.bf16.xpose.msra.mxu0 0
    %494 = vmatpush.bf16.xpose.msra.mxu0 0
    %495 = vmatpush.bf16.xpose.msra.mxu0 0
    %496 = vmatpush.bf16.xpose.msra.mxu0 0
    %497 = vmatpush.bf16.xpose.msra.mxu0 0
    %498 = vmatpush.bf16.xpose.msra.mxu0 0
    %499 = vmatpush.bf16.xpose.msra.mxu0 %v490
    %500 = vmatmul.bf16.gmra.mxu0 %v487
    %v501 = vpop.f32.mrf.mxu0
    %v502 = vadd.f32 0.0, %v501
    %v503 = vpop.f32.mrf.mxu0
    %504 = vdwg.mxu0
    %v505 = vsel %vm243, %v502, -inf
    %506 = vmax.xlane.f32.xlu0 %v505
    %v507 = vpop.xlane.xlu0 %506
    %v508 = vsub.f32 %v502, %v507
    %v509 = vmul.f32 %v508, 1.442695
    %v510 = vpow.pop %v509
    %v511 = vsel %vm243, %v510, 0.0
    %512 = vadd.xlane.f32.xlu0 %v511
    %v513 = vpop.xlane.xlu0 %512
    %v514 = vrcp.pop %v513
    %v515 = vmul.f32 %v510, %v514
    %v516 = vpack.c.bf16 %v515, %v515
    %517 = vrot.lane.b32.xlu0 %v340, 104
    %v518 = vpop.permute.xlu0 %517
    %v520 = vsel %vm243, %v516, 0
    %v523 = vsel %vm278, %v518, 0
    %525 = vmatpush.bf16.msra.mxu0 0
    %526 = vmatpush.bf16.msra.mxu0 0
    %527 = vmatpush.bf16.msra.mxu0 0
    %528 = vmatpush.bf16.msra.mxu0 0
    %529 = vmatpush.bf16.msra.mxu0 0
    %530 = vmatpush.bf16.msra.mxu0 0
    %531 = vmatpush.bf16.msra.mxu0 0
    %532 = vmatpush.bf16.msra.mxu0 %v523
    %533 = vmatmul.bf16.gmra.mxu0 %v520
    %v534 = vpop.f32.mrf.mxu0
    %v535 = vadd.f32 0.0, %v534
    %v536 = vpop.f32.mrf.mxu0
    %537 = vdwg.mxu0
    %v538 = vpack.c.bf16 %v535, %v535
    %s539 = scalar_lea.vmem %s6, 12
    %v540 = vld [vmem:[%s539] sm:$0xf]
    %v542 = vsel %vm243, %v538, 0
    %v545 = vsel %vm278, %v540, 0
    %547 = vmatpush.bf16.msra.mxu0 0
    %548 = vmatpush.bf16.msra.mxu0 0
    %549 = vmatpush.bf16.msra.mxu0 0
    %550 = vmatpush.bf16.msra.mxu0 0
    %551 = vmatpush.bf16.msra.mxu0 0
    %552 = vmatpush.bf16.msra.mxu0 0
    %553 = vmatpush.bf16.msra.mxu0 0
    %554 = vmatpush.bf16.msra.mxu0 %v545
    %555 = vmatmul.bf16.gmra.mxu0 %v542
    %v556 = vpop.f32.mrf.mxu0
    %v557 = vadd.f32 0.0, %v556
    %v558 = vpop.f32.mrf.mxu0
    %559 = vdwg.mxu0
    %v560 = vadd.f32 %v481, %v557
    %561 = vst.msk [vmem:[#allocation2] sm:$0xff] %vm141, %v560
    %v563 = vsel %vm243, %v238, 0
    %v566 = vsel %vm243, %v240, 0
    %568 = vmatpush.bf16.xpose.msra.mxu0 0
    %569 = vmatpush.bf16.xpose.msra.mxu0 0
    %570 = vmatpush.bf16.xpose.msra.mxu0 0
    %571 = vmatpush.bf16.xpose.msra.mxu0 0
    %572 = vmatpush.bf16.xpose.msra.mxu0 0
    %573 = vmatpush.bf16.xpose.msra.mxu0 0
    %574 = vmatpush.bf16.xpose.msra.mxu0 0
    %575 = vmatpush.bf16.xpose.msra.mxu0 %v566
    %576 = vmatmul.bf16.gmra.mxu0 %v563
    %v577 = vpop.f32.mrf.mxu0
    %v578 = vadd.f32 0.0, %v577
    %v579 = vpop.f32.mrf.mxu0
    %580 = vdwg.mxu0
    %v581 = vsel %vm243, %v578, -inf
    %582 = vmax.xlane.f32.xlu0 %v581
    %v583 = vpop.xlane.xlu0 %582
    %v584 = vsub.f32 %v578, %v583
    %v585 = vmul.f32 %v584, 1.442695
    %v586 = vpow.pop %v585
    %v587 = vsel %vm243, %v586, 0.0
    %588 = vadd.xlane.f32.xlu0 %v587
    %v589 = vpop.xlane.xlu0 %588
    %v590 = vrcp.pop %v589
    %v591 = vmul.f32 %v586, %v590
    %v592 = vpack.c.bf16 %v591, %v591
    %v594 = vsel %vm243, %v592, 0
    %v597 = vsel %vm278, %v242, 0
    %599 = vmatpush.bf16.msra.mxu0 0
    %600 = vmatpush.bf16.msra.mxu0 0
    %601 = vmatpush.bf16.msra.mxu0 0
    %602 = vmatpush.bf16.msra.mxu0 0
    %603 = vmatpush.bf16.msra.mxu0 0
    %604 = vmatpush.bf16.msra.mxu0 0
    %605 = vmatpush.bf16.msra.mxu0 0
    %606 = vmatpush.bf16.msra.mxu0 %v597
    %607 = vmatmul.bf16.gmra.mxu0 %v594
    %v608 = vpop.f32.mrf.mxu0
    %v609 = vadd.f32 0.0, %v608
    %v610 = vpop.f32.mrf.mxu0
    %611 = vdwg.mxu0
    %v612 = vpack.c.bf16 %v609, %v609
    %v613 = vld [vmem:[%s6] sm:$0xf]
    %v615 = vunpack.c.l.b16 %v238
    %v616 = vpack.c.b16 %v615, %v615
    %617 = vrot.lane.b32.xlu0 %v616, 120
    %v618 = vpop.permute.xlu0 %617
    %v620 = vunpack.c.l.b16 %v240
    %v621 = vpack.c.b16 %v620, %v620
    %622 = vrot.lane.b32.xlu0 %v621, 120
    %v623 = vpop.permute.xlu0 %622
    %v625 = vsel %vm243, %v618, 0
    %v628 = vsel %vm243, %v623, 0
    %630 = vmatpush.bf16.xpose.msra.mxu0 0
    %631 = vmatpush.bf16.xpose.msra.mxu0 0
    %632 = vmatpush.bf16.xpose.msra.mxu0 0
    %633 = vmatpush.bf16.xpose.msra.mxu0 0
    %634 = vmatpush.bf16.xpose.msra.mxu0 0
    %635 = vmatpush.bf16.xpose.msra.mxu0 0
    %636 = vmatpush.bf16.xpose.msra.mxu0 0
    %637 = vmatpush.bf16.xpose.msra.mxu0 %v628
    %638 = vmatmul.bf16.gmra.mxu0 %v625
    %v639 = vpop.f32.mrf.mxu0
    %v640 = vadd.f32 0.0, %v639
    %v641 = vpop.f32.mrf.mxu0
    %642 = vdwg.mxu0
    %v643 = vsel %vm243, %v640, -inf
    %644 = vmax.xlane.f32.xlu0 %v643
    %v645 = vpop.xlane.xlu0 %644
    %v646 = vsub.f32 %v640, %v645
    %v647 = vmul.f32 %v646, 1.442695
    %v648 = vpow.pop %v647
    %v649 = vsel %vm243, %v648, 0.0
    %650 = vadd.xlane.f32.xlu0 %v649
    %v651 = vpop.xlane.xlu0 %650
    %v652 = vrcp.pop %v651
    %v653 = vmul.f32 %v648, %v652
    %v654 = vpack.c.bf16 %v653, %v653
    %v656 = vunpack.c.l.b16 %v242
    %v657 = vpack.c.b16 %v656, %v656
    %658 = vrot.lane.b32.xlu0 %v657, 120
    %v659 = vpop.permute.xlu0 %658
    %v661 = vsel %vm243, %v654, 0
    %v664 = vsel %vm278, %v659, 0
    %666 = vmatpush.bf16.msra.mxu0 0
    %667 = vmatpush.bf16.msra.mxu0 0
    %668 = vmatpush.bf16.msra.mxu0 0
    %669 = vmatpush.bf16.msra.mxu0 0
    %670 = vmatpush.bf16.msra.mxu0 0
    %671 = vmatpush.bf16.msra.mxu0 0
    %672 = vmatpush.bf16.msra.mxu0 0
    %673 = vmatpush.bf16.msra.mxu0 %v664
    %674 = vmatmul.bf16.gmra.mxu0 %v661
    %v675 = vpop.f32.mrf.mxu0
    %v676 = vadd.f32 0.0, %v675
    %v677 = vpop.f32.mrf.mxu0
    %678 = vdwg.mxu0
    %v679 = vpack.c.bf16 %v676, %v676
    %v680 = vld [vmem:[%s363] sm:$0xf]
    %v682 = vsel %vm243, %v679, 0
    %v685 = vsel %vm278, %v680, 0
    %687 = vmatpush.bf16.msra.mxu0 0
    %688 = vmatpush.bf16.msra.mxu0 0
    %689 = vmatpush.bf16.msra.mxu0 0
    %690 = vmatpush.bf16.msra.mxu0 0
    %691 = vmatpush.bf16.msra.mxu0 0
    %692 = vmatpush.bf16.msra.mxu0 0
    %693 = vmatpush.bf16.msra.mxu0 0
    %694 = vmatpush.bf16.msra.mxu0 %v685
    %695 = vmatmul.bf16.gmra.mxu0 %v682
    %v696 = vpop.f32.mrf.mxu0
    %v697 = vadd.f32 0.0, %v696
    %v698 = vpop.f32.mrf.mxu0
    %699 = vdwg.mxu0
    %v701 = vsel %vm243, %v612, 0
    %v704 = vsel %vm278, %v613, 0
    %706 = vmatpush.bf16.msra.mxu0 0
    %707 = vmatpush.bf16.msra.mxu0 0
    %708 = vmatpush.bf16.msra.mxu0 0
    %709 = vmatpush.bf16.msra.mxu0 0
    %710 = vmatpush.bf16.msra.mxu0 0
    %711 = vmatpush.bf16.msra.mxu0 0
    %712 = vmatpush.bf16.msra.mxu0 0
    %713 = vmatpush.bf16.msra.mxu0 %v704
    %714 = vmatmul.bf16.gmra.mxu0 %v701
    %v715 = vpop.f32.mrf.mxu0
    %v716 = vadd.f32 %v697, %v715
    %v717 = vpop.f32.mrf.mxu0
    %718 = vdwg.mxu0
    %719 = vrot.lane.b32.xlu0 %v616, 112
    %v720 = vpop.permute.xlu0 %719
    %721 = vrot.lane.b32.xlu0 %v621, 112
    %v722 = vpop.permute.xlu0 %721
    %v724 = vsel %vm243, %v720, 0
    %v727 = vsel %vm243, %v722, 0
    %729 = vmatpush.bf16.xpose.msra.mxu0 0
    %730 = vmatpush.bf16.xpose.msra.mxu0 0
    %731 = vmatpush.bf16.xpose.msra.mxu0 0
    %732 = vmatpush.bf16.xpose.msra.mxu0 0
    %733 = vmatpush.bf16.xpose.msra.mxu0 0
    %734 = vmatpush.bf16.xpose.msra.mxu0 0
    %735 = vmatpush.bf16.xpose.msra.mxu0 0
    %736 = vmatpush.bf16.xpose.msra.mxu0 %v727
    %737 = vmatmul.bf16.gmra.mxu0 %v724
    %v738 = vpop.f32.mrf.mxu0
    %v739 = vadd.f32 0.0, %v738
    %v740 = vpop.f32.mrf.mxu0
    %741 = vdwg.mxu0
    %v742 = vsel %vm243, %v739, -inf
    %743 = vmax.xlane.f32.xlu0 %v742
    %v744 = vpop.xlane.xlu0 %743
    %v745 = vsub.f32 %v739, %v744
    %v746 = vmul.f32 %v745, 1.442695
    %v747 = vpow.pop %v746
    %v748 = vsel %vm243, %v747, 0.0
    %749 = vadd.xlane.f32.xlu0 %v748
    %v750 = vpop.xlane.xlu0 %749
    %v751 = vrcp.pop %v750
    %v752 = vmul.f32 %v747, %v751
    %v753 = vpack.c.bf16 %v752, %v752
    %754 = vrot.lane.b32.xlu0 %v657, 112
    %v755 = vpop.permute.xlu0 %754
    %v757 = vsel %vm243, %v753, 0
    %v760 = vsel %vm278, %v755, 0
    %762 = vmatpush.bf16.msra.mxu0 0
    %763 = vmatpush.bf16.msra.mxu0 0
    %764 = vmatpush.bf16.msra.mxu0 0
    %765 = vmatpush.bf16.msra.mxu0 0
    %766 = vmatpush.bf16.msra.mxu0 0
    %767 = vmatpush.bf16.msra.mxu0 0
    %768 = vmatpush.bf16.msra.mxu0 0
    %769 = vmatpush.bf16.msra.mxu0 %v760
    %770 = vmatmul.bf16.gmra.mxu0 %v757
    %v771 = vpop.f32.mrf.mxu0
    %v772 = vadd.f32 0.0, %v771
    %v773 = vpop.f32.mrf.mxu0
    %774 = vdwg.mxu0
    %v775 = vpack.c.bf16 %v772, %v772
    %v776 = vld [vmem:[%s460] sm:$0xf]
    %v778 = vsel %vm243, %v775, 0
    %v781 = vsel %vm278, %v776, 0
    %783 = vmatpush.bf16.msra.mxu0 0
    %784 = vmatpush.bf16.msra.mxu0 0
    %785 = vmatpush.bf16.msra.mxu0 0
    %786 = vmatpush.bf16.msra.mxu0 0
    %787 = vmatpush.bf16.msra.mxu0 0
    %788 = vmatpush.bf16.msra.mxu0 0
    %789 = vmatpush.bf16.msra.mxu0 0
    %790 = vmatpush.bf16.msra.mxu0 %v781
    %791 = vmatmul.bf16.gmra.mxu0 %v778
    %v792 = vpop.f32.mrf.mxu0
    %v793 = vadd.f32 0.0, %v792
    %v794 = vpop.f32.mrf.mxu0
    %795 = vdwg.mxu0
    %v796 = vadd.f32 %v716, %v793
    %797 = vrot.lane.b32.xlu0 %v616, 104
    %v798 = vpop.permute.xlu0 %797
    %799 = vrot.lane.b32.xlu0 %v621, 104
    %v800 = vpop.permute.xlu0 %799
    %v802 = vsel %vm243, %v798, 0
    %v805 = vsel %vm243, %v800, 0
    %807 = vmatpush.bf16.xpose.msra.mxu0 0
    %808 = vmatpush.bf16.xpose.msra.mxu0 0
    %809 = vmatpush.bf16.xpose.msra.mxu0 0
    %810 = vmatpush.bf16.xpose.msra.mxu0 0
    %811 = vmatpush.bf16.xpose.msra.mxu0 0
    %812 = vmatpush.bf16.xpose.msra.mxu0 0
    %813 = vmatpush.bf16.xpose.msra.mxu0 0
    %814 = vmatpush.bf16.xpose.msra.mxu0 %v805
    %815 = vmatmul.bf16.gmra.mxu0 %v802
    %v816 = vpop.f32.mrf.mxu0
    %v817 = vadd.f32 0.0, %v816
    %v818 = vpop.f32.mrf.mxu0
    %819 = vdwg.mxu0
    %v820 = vsel %vm243, %v817, -inf
    %821 = vmax.xlane.f32.xlu0 %v820
    %v822 = vpop.xlane.xlu0 %821
    %v823 = vsub.f32 %v817, %v822
    %v824 = vmul.f32 %v823, 1.442695
    %v825 = vpow.pop %v824
    %v826 = vsel %vm243, %v825, 0.0
    %827 = vadd.xlane.f32.xlu0 %v826
    %v828 = vpop.xlane.xlu0 %827
    %v829 = vrcp.pop %v828
    %v830 = vmul.f32 %v825, %v829
    %v831 = vpack.c.bf16 %v830, %v830
    %832 = vrot.lane.b32.xlu0 %v657, 104
    %v833 = vpop.permute.xlu0 %832
    %v835 = vsel %vm243, %v831, 0
    %v838 = vsel %vm278, %v833, 0
    %840 = vmatpush.bf16.msra.mxu0 0
    %841 = vmatpush.bf16.msra.mxu0 0
    %842 = vmatpush.bf16.msra.mxu0 0
    %843 = vmatpush.bf16.msra.mxu0 0
    %844 = vmatpush.bf16.msra.mxu0 0
    %845 = vmatpush.bf16.msra.mxu0 0
    %846 = vmatpush.bf16.msra.mxu0 0
    %847 = vmatpush.bf16.msra.mxu0 %v838
    %848 = vmatmul.bf16.gmra.mxu0 %v835
    %v849 = vpop.f32.mrf.mxu0
    %v850 = vadd.f32 0.0, %v849
    %v851 = vpop.f32.mrf.mxu0
    %852 = vdwg.mxu0
    %v853 = vpack.c.bf16 %v850, %v850
    %v854 = vld [vmem:[%s539] sm:$0xf]
    %v856 = vsel %vm243, %v853, 0
    %v859 = vsel %vm278, %v854, 0
    %861 = vmatpush.bf16.msra.mxu0 0
    %862 = vmatpush.bf16.msra.mxu0 0
    %863 = vmatpush.bf16.msra.mxu0 0
    %864 = vmatpush.bf16.msra.mxu0 0
    %865 = vmatpush.bf16.msra.mxu0 0
    %866 = vmatpush.bf16.msra.mxu0 0
    %867 = vmatpush.bf16.msra.mxu0 0
    %868 = vmatpush.bf16.msra.mxu0 %v859
    %869 = vmatmul.bf16.gmra.mxu0 %v856
    %v870 = vpop.f32.mrf.mxu0
    %v871 = vadd.f32 0.0, %v870
    %v872 = vpop.f32.mrf.mxu0
    %873 = vdwg.mxu0
    %v874 = vadd.f32 %v796, %v871
    %875 = vst.msk [vmem:[#allocation2 + $0x8] sm:$0xff] %vm141, %v874
    %v876 = vld [vmem:[#allocation2] sm:$0xff]
    %v877 = vld [vmem:[#allocation2 + $0x8] sm:$0xff]
    %v878 = vperm.slane %v106, 0
    %v879 = vadd.f32 %v876, %v878
    %v880 = vadd.f32 %v877, %v878
    %v881 = vunpack.c.l.bf16 %v113
    %v882 = vunpack.c.l.bf16 %v114
    %v883 = vadd.f32 %v879, %v881
    %v884 = vadd.f32 %v880, %v882
    %v885 = vsel %vm141, %v883, 0.0
    %886 = vadd.xlane.f32.xlu0 %v885
    %v887 = vpop.xlane.xlu0 %886
    %v888 = vsel %vm141, %v884, 0.0
    %889 = vadd.xlane.f32.xlu0 %v888
    %v890 = vpop.xlane.xlu0 %889
    %v891 = vrcp.pop 32.0
    %v892 = vmul.f32 32.0, %v891
    %v893 = vsub.f32 1.0, %v892
    %v894 = vmul.f32 %v891, %v893
    %v895 = vadd.f32 %v891, %v894
    %vm896 = vweird.f32 %v891
    %v897 = vsel %vm896, %v891, %v895
    %v898 = vmul.f32 %v887, %v897
    %v899 = vmul.f32 %v890, %v897
    %v900 = vsub.f32 %v883, %v898
    %v901 = vsub.f32 %v884, %v899
    %v902 = vmul.f32 %v900, %v900
    %v903 = vmul.f32 %v901, %v901
    %v904 = vsel %vm141, %v902, 0.0
    %905 = vadd.xlane.f32.xlu0 %v904
    %v906 = vpop.xlane.xlu0 %905
    %v907 = vsel %vm141, %v903, 0.0
    %908 = vadd.xlane.f32.xlu0 %v907
    %v909 = vpop.xlane.xlu0 %908
    %v910 = vmul.f32 %v906, %v897
    %v911 = vmul.f32 %v909, %v897
    %v912 = vadd.f32 %v910, 1e-05
    %v913 = vadd.f32 %v911, 1e-05
    %v914 = vrsqrt.pop %v912
    %v915 = vmul.f32 %v914, %v912
    %v916 = vmul.f32 %v915, %v914
    %v917 = vmul.f32 0.5, %v916
    %v918 = vsub.f32 1.5, %v917
    %v919 = vmul.f32 %v914, %v918
    %vm920 = vweird.f32 %v912
    %vm921 = vweird.f32 %v914
    %vm922 = vmor %vm920, %vm921
    %v923 = vsel %vm922, %v914, %v919
    %v924 = vrsqrt.pop %v913
    %v925 = vmul.f32 %v924, %v913
    %v926 = vmul.f32 %v925, %v924
    %v927 = vmul.f32 0.5, %v926
    %v928 = vsub.f32 1.5, %v927
    %v929 = vmul.f32 %v924, %v928
    %vm930 = vweird.f32 %v913
    %vm931 = vweird.f32 %v924
    %vm932 = vmor %vm930, %vm931
    %v933 = vsel %vm932, %v924, %v929
    %v934 = vmul.f32 %v900, %v923
    %v935 = vmul.f32 %v901, %v933
    %v936 = vperm.slane %v108, 0
    %v937 = vmul.f32 %v934, %v936
    %v938 = vmul.f32 %v935, %v936
    %v939 = vperm.slane %v109, 0
    %v940 = vadd.f32 %v937, %v939
    %v941 = vadd.f32 %v938, %v939
    %v942 = vpack.c.bf16 %v941, %v940
    %v943 = vld [vmem:[%s7] sm:$0xf]
    %v944 = vld [vmem:[%s7 + $0x4] sm:$0xf]
    %v945 = vld [vmem:[%s7 + $0x8] sm:$0xf]
    %v946 = vld [vmem:[%s7 + $0xc] sm:$0xf]
    %v948 = vperm.slane %v112, 0
    %v954 = vunpack.c.l.b16 %v943
    %v955 = vunpack.c.l.b16 %v944
    %v956 = vunpack.c.l.b16 %v945
    %v957 = vunpack.c.l.b16 %v946
    %v958 = vpack.c.b16 %v955, %v954
    %v959 = vpack.c.b16 %v957, %v956
    %v963 = vsel %vm141, %v942, 0
    %965 = vmatpush.bf16.msra.mxu0 0
    %966 = vmatpush.bf16.msra.mxu0 0
    %967 = vmatpush.bf16.msra.mxu0 0
    %968 = vmatpush.bf16.msra.mxu0 0
    %969 = vmatpush.bf16.msra.mxu0 0
    %970 = vmatpush.bf16.msra.mxu0 0
    %971 = vmatpush.bf16.msra.mxu0 %v959
    %972 = vmatpush.bf16.msra.mxu0 %v958
    %973 = vmatmul.bf16.gmra.mxu0 %v963
    %v974 = vpop.f32.mrf.mxu0
    %v975 = vadd.f32 %v948, %v974
    %v976 = vpop.f32.mrf.mxu0
    %v977 = vadd.f32 %v948, %v976
    %978 = vdwg.mxu0
    %v979 = vmax.f32 %v975, 0.0
    %v980 = vmax.f32 %v977, 0.0
    %v981 = vpack.c.bf16 %v980, %v979
    %v982 = vld [vmem:[%s8] sm:$0xf]
    %v983 = vld [vmem:[%s8 + $0x4] sm:$0xf]
    %v984 = vld [vmem:[%s8 + $0x8] sm:$0xf]
    %v985 = vld [vmem:[%s8 + $0xc] sm:$0xf]
    %v986 = vld [vmem:[%s8 + $0x10] sm:$0xf]
    %v987 = vld [vmem:[%s8 + $0x14] sm:$0xf]
    %v988 = vld [vmem:[%s8 + $0x18] sm:$0xf]
    %v989 = vld [vmem:[%s8 + $0x1c] sm:$0xf]
    %v990 = vld [vmem:[%s8 + $0x20] sm:$0xf]
    %v991 = vld [vmem:[%s8 + $0x24] sm:$0xf]
    %v992 = vld [vmem:[%s8 + $0x28] sm:$0xf]
    %v993 = vld [vmem:[%s8 + $0x2c] sm:$0xf]
    %v994 = vld [vmem:[%s8 + $0x30] sm:$0xf]
    %v995 = vld [vmem:[%s8 + $0x34] sm:$0xf]
    %v996 = vld [vmem:[%s8 + $0x38] sm:$0xf]
    %v997 = vld [vmem:[%s8 + $0x3c] sm:$0xf]
    %v998 = vperm.slane %v107, 0
    %v1015 = vunpack.c.l.b16 %v982
    %v1016 = vunpack.c.l.b16 %v983
    %v1017 = vunpack.c.l.b16 %v984
    %v1018 = vunpack.c.l.b16 %v985
    %v1019 = vunpack.c.l.b16 %v986
    %v1020 = vunpack.c.l.b16 %v987
    %v1021 = vunpack.c.l.b16 %v988
    %v1022 = vunpack.c.l.b16 %v989
    %v1023 = vunpack.c.l.b16 %v990
    %v1024 = vunpack.c.l.b16 %v991
    %v1025 = vunpack.c.l.b16 %v992
    %v1026 = vunpack.c.l.b16 %v993
    %v1027 = vunpack.c.l.b16 %v994
    %v1028 = vunpack.c.l.b16 %v995
    %v1029 = vunpack.c.l.b16 %v996
    %v1030 = vunpack.c.l.b16 %v997
    %v1031 = vpack.c.b16 %v1016, %v1015
    %v1032 = vpack.c.b16 %v1018, %v1017
    %v1033 = vpack.c.b16 %v1020, %v1019
    %v1034 = vpack.c.b16 %v1022, %v1021
    %v1035 = vpack.c.b16 %v1024, %v1023
    %v1036 = vpack.c.b16 %v1026, %v1025
    %v1037 = vpack.c.b16 %v1028, %v1027
    %v1038 = vpack.c.b16 %v1030, %v1029
    %1047 = vmatpush.bf16.msra.mxu0 %v1038
    %1048 = vmatpush.bf16.msra.mxu0 %v1037
    %1049 = vmatpush.bf16.msra.mxu0 %v1036
    %1050 = vmatpush.bf16.msra.mxu0 %v1035
    %1051 = vmatpush.bf16.msra.mxu0 %v1034
    %1052 = vmatpush.bf16.msra.mxu0 %v1033
    %1053 = vmatpush.bf16.msra.mxu0 %v1032
    %1054 = vmatpush.bf16.msra.mxu0 %v1031
    %1055 = vmatmul.bf16.gmra.mxu0 %v981
    %v1056 = vpop.f32.mrf.mxu0
    %v1057 = vadd.f32 %v998, %v1056
    %v1058 = vpop.f32.mrf.mxu0
    %v1059 = vadd.f32 %v998, %v1058
    %1060 = vdwg.mxu0
    %v1061 = vadd.f32 %v1057, %v940
    %v1062 = vadd.f32 %v1059, %v941
    %v1063 = vsel %vm141, %v1061, 0.0
    %1064 = vadd.xlane.f32.xlu0 %v1063
    %v1065 = vpop.xlane.xlu0 %1064
    %v1066 = vsel %vm141, %v1062, 0.0
    %1067 = vadd.xlane.f32.xlu0 %v1066
    %v1068 = vpop.xlane.xlu0 %1067
    %v1069 = vmul.f32 %v1065, %v897
    %v1070 = vmul.f32 %v1068, %v897
    %v1071 = vsub.f32 %v1061, %v1069
    %v1072 = vsub.f32 %v1062, %v1070
    %v1073 = vmul.f32 %v1071, %v1071
    %v1074 = vmul.f32 %v1072, %v1072
    %v1075 = vsel %vm141, %v1073, 0.0
    %1076 = vadd.xlane.f32.xlu0 %v1075
    %v1077 = vpop.xlane.xlu0 %1076
    %v1078 = vsel %vm141, %v1074, 0.0
    %1079 = vadd.xlane.f32.xlu0 %v1078
    %v1080 = vpop.xlane.xlu0 %1079
    %v1081 = vmul.f32 %v1077, %v897
    %v1082 = vmul.f32 %v1080, %v897
    %v1083 = vadd.f32 %v1081, 1e-05
    %v1084 = vadd.f32 %v1082, 1e-05
    %v1085 = vrsqrt.pop %v1083
    %v1086 = vmul.f32 %v1085, %v1083
    %v1087 = vmul.f32 %v1086, %v1085
    %v1088 = vmul.f32 0.5, %v1087
    %v1089 = vsub.f32 1.5, %v1088
    %v1090 = vmul.f32 %v1085, %v1089
    %vm1091 = vweird.f32 %v1083
    %vm1092 = vweird.f32 %v1085
    %vm1093 = vmor %vm1091, %vm1092
    %v1094 = vsel %vm1093, %v1085, %v1090
    %v1095 = vrsqrt.pop %v1084
    %v1096 = vmul.f32 %v1095, %v1084
    %v1097 = vmul.f32 %v1096, %v1095
    %v1098 = vmul.f32 0.5, %v1097
    %v1099 = vsub.f32 1.5, %v1098
    %v1100 = vmul.f32 %v1095, %v1099
    %vm1101 = vweird.f32 %v1084
    %vm1102 = vweird.f32 %v1095
    %vm1103 = vmor %vm1101, %vm1102
    %v1104 = vsel %vm1103, %v1095, %v1100
    %v1105 = vmul.f32 %v1071, %v1094
    %v1106 = vmul.f32 %v1072, %v1104
    %v1107 = vperm.slane %v110, 0
    %v1108 = vmul.f32 %v1105, %v1107
    %v1109 = vmul.f32 %v1106, %v1107
    %v1110 = vperm.slane %v111, 0
    %v1111 = vadd.f32 %v1108, %v1110
    %v1112 = vadd.f32 %v1109, %v1110
    %1113 = vst.msk [vmem:[#allocation11] sm:$0xff] %vm141, %v1111
    %1114 = vst.msk [vmem:[#allocation11 + $0x8] sm:$0xff] %vm141, %v1112
    // Predicated region
    $region62: #{tpu_custom_call.1} parent=1 // pred_check
      _
    $region63: #{tpu_custom_call.1} parent=1 // pred_check_branch
      %1116 = sbr.rel (0) target = $region65
    $region64: #{tpu_custom_call.1} parent=1 // pred_region
      %1118 = vsyncadd [#allocation5], 0
      %s1119 = sshll.u32 [#allocation11], 4
      %s1120 = int_to_ptr.vmem [resolvable:$true] %s1119
      %s1121 = sshll.u32 %s11, 4
      %s1122 = int_to_ptr.hbm [resolvable:$true] %s1121
      %1127 = dma.vmem_to_hbm [thread:$0]  %s1120, 256, %s1122, [#allocation5], 128, 128, 8
    $region65: #{tpu_custom_call.1} parent=1 // pred_fallthru
      _
    // Predicated region
    $region66: #{tpu_custom_call.1} parent=1 // pred_check
      _
    $region67: #{tpu_custom_call.1} parent=1 // pred_check_branch
      %1129 = sbr.rel (0) target = $region69
    $region68: #{tpu_custom_call.1} parent=1 // pred_region
      %1131 = dma.done [#allocation5], 256
    $region69: #{tpu_custom_call.1} parent=1 // pred_fallthru
      _
    %1132 = vsyncpa [#allocation4], 1
    %1133 = vsyncpa [#allocation7], 1
    %1134 = vsyncpa [#allocation10], 1
    %1135 = vsyncpa [#allocation5], 1

</llo_original>
